<compile_context>
chip_gen: v7x
topology: tpu7x:2x2x1
jax: 0.10.0
libtpu: 0.0.40
codegen_flags: <defaults>
</compile_context>

<pallas_src>
import math

import numpy as np

import jax
import jax.numpy as jnp
from jax import lax
from jax.experimental import pallas as pl
from jax.experimental.pallas import tpu as pltpu

# ----- model hyperparameters (small, consistent with the module defaults) -----
D_MODEL = 16
NHEAD = 4
HEAD_DIM = D_MODEL // NHEAD
DIM_FF = 16          # must equal D_MODEL for the packed weight-stack layout used below
SEQ = 8
BATCH = 2            # module-convention example batch

assert DIM_FF == D_MODEL, "packed parameter stack assumes dim_feedforward == d_model"

NEG_INF = -1e30
INST_BLOCK = 8       # samples (independent attention instances) processed per grid step


def _make_constants(inst_block):
    """Host-built constants: stacked head lane masks and block-diagonal attention bias."""
    r = inst_block * SEQ
    hmask = np.zeros((NHEAD * r, D_MODEL), np.float32)
    for h in range(NHEAD):
        hmask[h * r:(h + 1) * r, h * HEAD_DIM:(h + 1) * HEAD_DIM] = 1.0
    bias_one = np.full((r, r), NEG_INF, np.float32)
    for b in range(inst_block):
        bias_one[b * SEQ:(b + 1) * SEQ, b * SEQ:(b + 1) * SEQ] = 0.0
    bias = np.tile(bias_one, (NHEAD, 1))        # (NHEAD*r, r)
    return jnp.asarray(hmask), jnp.asarray(bias)


def _make_kernel(inst_block):
    R = inst_block * SEQ
    D = D_MODEL
    scale = 1.0 / math.sqrt(HEAD_DIM)

    def kernel(x_ref, wqkv_ref, bqkv_ref, wstk_ref, brest_ref, hmask_ref, bias_ref, o_ref):
        # x_ref: (R, D); wqkv_ref: (D, 3D) = [wq|wk|wv]; bqkv_ref: (1, 3D);
        # wstk_ref: (3D, D) = [wo; w1; w2] stacked on sublanes; brest_ref: (1, 3D) = [bo|b1|b2];
        # hmask_ref: (NHEAD*R, D); bias_ref: (NHEAD*R, R); o_ref: (R, D).
        x = x_ref[...]                                            # (R, D) f32

        # ---- fused QKV in-projection: one MXU push instead of three ----
        qkv = jnp.dot(x, wqkv_ref[...], preferred_element_type=jnp.float32) + bqkv_ref[...]
        q = qkv[:, 0 * D:1 * D]
        k = qkv[:, 1 * D:2 * D]
        v = qkv[:, 2 * D:3 * D]

        # ---- all heads in one score matmul: stack head-masked Q along sublanes ----
        hmask = hmask_ref[...]                                    # (NHEAD*R, D) in {0,1}
        q_stack = jnp.concatenate([q] * NHEAD, axis=0) * hmask    # (NHEAD*R, D)
        s = lax.dot_general(q_stack, k, (((1,), (1,)), ((), ())),
                            preferred_element_type=jnp.float32)   # (NHEAD*R, R)
        s = s * scale + bias_ref[...]                             # block-diag per-sample bias

        # ---- ONE softmax over lanes for all heads / samples (exact divide) ----
        s = s - jnp.max(s, axis=-1, keepdims=True)
        p = jnp.exp(s)
        p = p / jnp.sum(p, axis=-1, keepdims=True)

        # ---- one PV matmul; rebuild concatenated heads via masked sublane reduce ----
        o_stack = jnp.dot(p, v, preferred_element_type=jnp.float32) * hmask   # (NHEAD*R, D)
        attn = o_stack[0 * R:1 * R, :]
        for h in range(1, NHEAD):
            attn = attn + o_stack[h * R:(h + 1) * R, :]

        # ---- out-projection + residual 1 (dropout1 identity at p=0) ----
        brest = brest_ref[...]                                    # (1, 3D)
        src = x + jnp.dot(attn, wstk_ref[0 * D:1 * D, :],
                          preferred_element_type=jnp.float32) + brest[:, 0 * D:1 * D]

        # ---- feed-forward + residual 2 (nn.LeakyReLU(True): slope 1.0 -> identity, folded away) ----
        h1 = jnp.dot(src, wstk_ref[1 * D:2 * D, :],
                     preferred_element_type=jnp.float32) + brest[:, 1 * D:2 * D]
        ff = jnp.dot(h1, wstk_ref[2 * D:3 * D, :],
                     preferred_element_type=jnp.float32) + brest[:, 2 * D:3 * D]
        o_ref[...] = (src + ff).astype(o_ref.dtype)

    return kernel


def pack_params(p):
    """Pack the 12 small parameters into the layouts the kernel wants."""
    w_qkv = jnp.concatenate([p["wq"], p["wk"], p["wv"]], axis=1)     # (D, 3D) fused-QKV RHS
    b_qkv = jnp.concatenate([p["bq"], p["bk"], p["bv"]], axis=1)     # (1, 3D)
    w_stack = jnp.concatenate([p["wo"], p["w1"], p["w2"]], axis=0)   # (3D, D) sublane-stacked
    b_rest = jnp.concatenate([p["bo"], p["b1"], p["b2"]], axis=1)    # (1, 3D)
    return w_qkv, b_qkv, w_stack, b_rest


def transformer_encoder_layer(src_sbd, w_qkv, b_qkv, w_stack, b_rest, inst_block=INST_BLOCK):
    """src_sbd: (S, B, D) float32 (PyTorch module convention). Returns (S, B, D)."""
    S, B, D = src_sbd.shape
    assert S == SEQ and D == D_MODEL

    # fold batch into the sublane axis; each sample is a contiguous block of S rows
    x2d = jnp.transpose(src_sbd, (1, 0, 2)).reshape(B * S, D)

    n_blocks = (B + inst_block - 1) // inst_block
    b_pad = n_blocks * inst_block
    if b_pad != B:       # pad with zero samples; block-diagonal bias keeps them isolated
        x2d = jnp.pad(x2d, ((0, (b_pad - B) * S), (0, 0)))

    R = inst_block * S
    hmask, bias = _make_constants(inst_block)
    kernel = _make_kernel(inst_block)
    const = lambda i: (0, 0)

    out2d = pl.pallas_call(
        kernel,
        out_shape=jax.ShapeDtypeStruct((b_pad * S, D), src_sbd.dtype),
        grid=(n_blocks,),
        in_specs=[
            pl.BlockSpec((R, D), lambda i: (i, 0)),
            pl.BlockSpec(w_qkv.shape, const),
            pl.BlockSpec(b_qkv.shape, const),
            pl.BlockSpec(w_stack.shape, const),
            pl.BlockSpec(b_rest.shape, const),
            pl.BlockSpec(hmask.shape, const),
            pl.BlockSpec(bias.shape, const),
        ],
        out_specs=pl.BlockSpec((R, D), lambda i: (i, 0)),
        compiler_params=pltpu.CompilerParams(dimension_semantics=("parallel",)),
    )(x2d, w_qkv, b_qkv, w_stack, b_rest, hmask, bias)

    out = out2d[:B * S].reshape(B, S, D)
    return jnp.transpose(out, (1, 0, 2))


def init_params(key):
    """Deterministic synthetic parameters (PyTorch shapes, stored transposed so y = x @ W)."""
    ks = jax.random.split(key, 10)
    s = 0.1
    wq = s * jax.random.normal(ks[0], (D_MODEL, D_MODEL), jnp.float32)
    wk = s * jax.random.normal(ks[1], (D_MODEL, D_MODEL), jnp.float32)
    wv = s * jax.random.normal(ks[2], (D_MODEL, D_MODEL), jnp.float32)
    bq = s * jax.random.normal(ks[3], (1, D_MODEL), jnp.float32)
    bk = s * jax.random.normal(ks[4], (1, D_MODEL), jnp.float32)
    bv = s * jax.random.normal(ks[5], (1, D_MODEL), jnp.float32)
    wo = s * jax.random.normal(ks[6], (D_MODEL, D_MODEL), jnp.float32)
    bo = jnp.zeros((1, D_MODEL), jnp.float32)
    w1 = s * jax.random.normal(ks[7], (D_MODEL, DIM_FF), jnp.float32)
    b1 = s * jax.random.normal(ks[8], (1, DIM_FF), jnp.float32)
    w2 = s * jax.random.normal(ks[9], (DIM_FF, D_MODEL), jnp.float32)
    b2 = jnp.zeros((1, D_MODEL), jnp.float32)
    return dict(wq=wq, wk=wk, wv=wv, bq=bq, bk=bk, bv=bv, wo=wo, bo=bo,
                w1=w1, b1=b1, w2=w2, b2=b2)


def reference(x_bsd, p):
    """Pure-JAX reference of the same forward pass (batch-first layout) for verification."""
    q = x_bsd @ p["wq"] + p["bq"]
    k = x_bsd @ p["wk"] + p["bk"]
    v = x_bsd @ p["wv"] + p["bv"]
    B, S, D = x_bsd.shape
    qh = q.reshape(B, S, NHEAD, HEAD_DIM).transpose(0, 2, 1, 3)
    kh = k.reshape(B, S, NHEAD, HEAD_DIM).transpose(0, 2, 1, 3)
    vh = v.reshape(B, S, NHEAD, HEAD_DIM).transpose(0, 2, 1, 3)
    sc = jnp.einsum("bhqd,bhkd->bhqk", qh, kh) / math.sqrt(HEAD_DIM)
    pr = jax.nn.softmax(sc, axis=-1)
    o = jnp.einsum("bhqk,bhkd->bhqd", pr, vh).transpose(0, 2, 1, 3).reshape(B, S, D)
    attn = o @ p["wo"] + p["bo"]
    src = x_bsd + attn
    h1 = src @ p["w1"] + p["b1"]          # LeakyReLU(slope=1.0) is the identity
    ff = h1 @ p["w2"] + p["b2"]
    return src + ff


if __name__ == "__main__":
    key = jax.random.PRNGKey(0)
    k_x, k_p, k_big = jax.random.split(key, 3)

    params = init_params(k_p)
    packed = pack_params(params)

    # ---- primary test: module-convention input (seq, batch, d_model) = (8, 2, 16) ----
    src_sbd = jax.random.normal(k_x, (SEQ, BATCH, D_MODEL), jnp.float32)
    out_sbd = transformer_encoder_layer(src_sbd, *packed)
    out_sbd = jax.block_until_ready(out_sbd)

    ref_bsd = reference(jnp.transpose(src_sbd, (1, 0, 2)), params)
    ref_sbd = jnp.transpose(ref_bsd, (1, 0, 2))
    assert out_sbd.shape == (SEQ, BATCH, D_MODEL)
    # Softmax now uses an exact divide; remaining slack covers the TPU default matmul precision
    # difference between the in-kernel MXU dots and the XLA reference dots.
    assert jnp.allclose(out_sbd, ref_sbd, atol=5e-3, rtol=5e-3), "mismatch vs reference (small)"

    # ---- batched test: many TranAD windows folded into ONE pallas_call (grid over sample blocks,
    #      "parallel" so both v7x TensorCores engage); verifies the multi-step grid path ----
    BIG_B = 64
    src_big = jax.random.normal(k_big, (SEQ, BIG_B, D_MODEL), jnp.float32)
    out_big = jax.block_until_ready(transformer_encoder_layer(src_big, *packed))
    ref_big = jnp.transpose(reference(jnp.transpose(src_big, (1, 0, 2)), params), (1, 0, 2))
    assert out_big.shape == (SEQ, BIG_B, D_MODEL)
    assert jnp.allclose(out_big, ref_big, atol=5e-3, rtol=5e-3), "mismatch vs reference (batched)"

    print("KERNEL_OK")
</pallas_src>

<mosaic_0001>
module attributes {stable_mosaic.version = 11 : i64} {
  func.func @kernel(%arg0: i32, %arg1: memref<64x16xf32, #tpu.memory_space<vmem>>, %arg2: memref<16x48xf32, #tpu.memory_space<vmem>>, %arg3: memref<1x48xf32, #tpu.memory_space<vmem>>, %arg4: memref<48x16xf32, #tpu.memory_space<vmem>>, %arg5: memref<1x48xf32, #tpu.memory_space<vmem>>, %arg6: memref<256x16xf32, #tpu.memory_space<vmem>>, %arg7: memref<256x64xf32, #tpu.memory_space<vmem>>, %arg8: memref<64x16xf32, #tpu.memory_space<vmem>>) attributes {dimension_semantics = [#tpu.dimension_semantics<parallel>], iteration_bounds = array<i64: 1>, scalar_prefetch = 0 : i64, scratch_operands = 0 : i64, tpu.core_type = #tpu.core_type<tc>, window_params = [{transform_indices = @transform_0, window_bounds = array<i64: 64, 16>}, {pipeline_mode = #tpu.pipeline_mode<synchronous>, transform_indices = @transform_1, window_bounds = array<i64: 16, 48>}, {pipeline_mode = #tpu.pipeline_mode<synchronous>, transform_indices = @transform_2, window_bounds = array<i64: 1, 48>}, {pipeline_mode = #tpu.pipeline_mode<synchronous>, transform_indices = @transform_3, window_bounds = array<i64: 48, 16>}, {pipeline_mode = #tpu.pipeline_mode<synchronous>, transform_indices = @transform_4, window_bounds = array<i64: 1, 48>}, {pipeline_mode = #tpu.pipeline_mode<synchronous>, transform_indices = @transform_5, window_bounds = array<i64: 256, 16>}, {pipeline_mode = #tpu.pipeline_mode<synchronous>, transform_indices = @transform_6, window_bounds = array<i64: 256, 64>}, {transform_indices = @transform_7, window_bounds = array<i64: 64, 16>}]} {
    %c0 = arith.constant 0 : index
    %c0_0 = arith.constant 0 : index
    %0 = vector.load %arg1[%c0, %c0_0] : memref<64x16xf32, #tpu.memory_space<vmem>>, vector<64x16xf32>
    %c0_1 = arith.constant 0 : index
    %c0_2 = arith.constant 0 : index
    %1 = vector.load %arg2[%c0_1, %c0_2] : memref<16x48xf32, #tpu.memory_space<vmem>>, vector<16x48xf32>
    %cst = arith.constant dense<0.000000e+00> : vector<64x48xf32>
    %2 = tpu.matmul %0, %1, %cst {dimension_numbers = #tpu.dot_dimension_numbers<[1], [0], [0], [1], [0, 0, 1, 1], [], []>} : vector<64x16xf32>, vector<16x48xf32>, vector<64x48xf32> -> vector<64x48xf32>
    %c0_3 = arith.constant 0 : index
    %c0_4 = arith.constant 0 : index
    %3 = vector.load %arg3[%c0_3, %c0_4] : memref<1x48xf32, #tpu.memory_space<vmem>>, vector<1x48xf32>
    %4 = vector.broadcast %3 : vector<1x48xf32> to vector<64x48xf32>
    %5 = arith.addf %2, %4 : vector<64x48xf32>
    %6 = vector.extract_strided_slice %5 {offsets = [0, 0], sizes = [64, 16], strides = [1, 1]} : vector<64x48xf32> to vector<64x16xf32>
    %7 = vector.extract_strided_slice %5 {offsets = [0, 16], sizes = [64, 16], strides = [1, 1]} : vector<64x48xf32> to vector<64x16xf32>
    %8 = vector.extract_strided_slice %5 {offsets = [0, 32], sizes = [64, 16], strides = [1, 1]} : vector<64x48xf32> to vector<64x16xf32>
    %c0_5 = arith.constant 0 : index
    %c0_6 = arith.constant 0 : index
    %9 = vector.load %arg6[%c0_5, %c0_6] : memref<256x16xf32, #tpu.memory_space<vmem>>, vector<256x16xf32>
    %10 = tpu.concatenate %6, %6, %6, %6 in 0 : vector<64x16xf32>, vector<64x16xf32>, vector<64x16xf32>, vector<64x16xf32> -> vector<256x16xf32>
    %11 = arith.mulf %10, %9 : vector<256x16xf32>
    %cst_7 = arith.constant dense<0.000000e+00> : vector<256x64xf32>
    %12 = tpu.matmul %11, %7, %cst_7 {dimension_numbers = #tpu.dot_dimension_numbers<[1], [1], [0], [0], [0, 0, 1, 0], [], []>} : vector<256x16xf32>, vector<64x16xf32>, vector<256x64xf32> -> vector<256x64xf32>
    %cst_8 = arith.constant 5.000000e-01 : f32
    %13 = vector.broadcast %cst_8 : f32 to vector<256x64xf32>
    %14 = arith.mulf %12, %13 : vector<256x64xf32>
    %c0_9 = arith.constant 0 : index
    %c0_10 = arith.constant 0 : index
    %15 = vector.load %arg7[%c0_9, %c0_10] : memref<256x64xf32, #tpu.memory_space<vmem>>, vector<256x64xf32>
    %16 = arith.addf %14, %15 : vector<256x64xf32>
    %cst_11 = arith.constant dense<0xFF800000> : vector<256xf32>
    %17 = vector.multi_reduction <maximumf>, %16, %cst_11 [1] : vector<256x64xf32> to vector<256xf32>
    %18 = vector.shape_cast %17 : vector<256xf32> to vector<256x1xf32>
    %19 = vector.broadcast %18 : vector<256x1xf32> to vector<256x64xf32>
    %20 = arith.subf %16, %19 : vector<256x64xf32>
    %21 = math.exp %20 : vector<256x64xf32>
    %cst_12 = arith.constant dense<0.000000e+00> : vector<256xf32>
    %22 = vector.multi_reduction <add>, %21, %cst_12 [1] : vector<256x64xf32> to vector<256xf32>
    %23 = vector.shape_cast %22 : vector<256xf32> to vector<256x1xf32>
    %24 = vector.broadcast %23 : vector<256x1xf32> to vector<256x64xf32>
    %25 = arith.divf %21, %24 : vector<256x64xf32>
    %cst_13 = arith.constant dense<0.000000e+00> : vector<256x16xf32>
    %26 = tpu.matmul %25, %8, %cst_13 {dimension_numbers = #tpu.dot_dimension_numbers<[1], [0], [0], [1], [0, 0, 1, 1], [], []>} : vector<256x64xf32>, vector<64x16xf32>, vector<256x16xf32> -> vector<256x16xf32>
    %27 = arith.mulf %26, %9 : vector<256x16xf32>
    %28 = vector.extract_strided_slice %27 {offsets = [0, 0], sizes = [64, 16], strides = [1, 1]} : vector<256x16xf32> to vector<64x16xf32>
    %29 = vector.extract_strided_slice %27 {offsets = [64, 0], sizes = [64, 16], strides = [1, 1]} : vector<256x16xf32> to vector<64x16xf32>
    %30 = arith.addf %28, %29 : vector<64x16xf32>
    %31 = vector.extract_strided_slice %27 {offsets = [128, 0], sizes = [64, 16], strides = [1, 1]} : vector<256x16xf32> to vector<64x16xf32>
    %32 = arith.addf %30, %31 : vector<64x16xf32>
    %33 = vector.extract_strided_slice %27 {offsets = [192, 0], sizes = [64, 16], strides = [1, 1]} : vector<256x16xf32> to vector<64x16xf32>
    %34 = arith.addf %32, %33 : vector<64x16xf32>
    %c0_14 = arith.constant 0 : index
    %c0_15 = arith.constant 0 : index
    %35 = vector.load %arg5[%c0_14, %c0_15] : memref<1x48xf32, #tpu.memory_space<vmem>>, vector<1x48xf32>
    %c0_16 = arith.constant 0 : index
    %c0_17 = arith.constant 0 : index
    %36 = vector.load %arg4[%c0_16, %c0_17] : memref<48x16xf32, #tpu.memory_space<vmem>>, vector<16x16xf32>
    %cst_18 = arith.constant dense<0.000000e+00> : vector<64x16xf32>
    %37 = tpu.matmul %34, %36, %cst_18 {dimension_numbers = #tpu.dot_dimension_numbers<[1], [0], [0], [1], [0, 0, 1, 1], [], []>} : vector<64x16xf32>, vector<16x16xf32>, vector<64x16xf32> -> vector<64x16xf32>
    %38 = arith.addf %0, %37 : vector<64x16xf32>
    %39 = vector.extract_strided_slice %35 {offsets = [0, 0], sizes = [1, 16], strides = [1, 1]} : vector<1x48xf32> to vector<1x16xf32>
    %40 = vector.broadcast %39 : vector<1x16xf32> to vector<64x16xf32>
    %41 = arith.addf %38, %40 : vector<64x16xf32>
    %c16 = arith.constant 16 : index
    %c0_19 = arith.constant 0 : index
    %42 = vector.load %arg4[%c16, %c0_19] : memref<48x16xf32, #tpu.memory_space<vmem>>, vector<16x16xf32>
    %cst_20 = arith.constant dense<0.000000e+00> : vector<64x16xf32>
    %43 = tpu.matmul %41, %42, %cst_20 {dimension_numbers = #tpu.dot_dimension_numbers<[1], [0], [0], [1], [0, 0, 1, 1], [], []>} : vector<64x16xf32>, vector<16x16xf32>, vector<64x16xf32> -> vector<64x16xf32>
    %44 = vector.extract_strided_slice %35 {offsets = [0, 16], sizes = [1, 16], strides = [1, 1]} : vector<1x48xf32> to vector<1x16xf32>
    %45 = vector.broadcast %44 : vector<1x16xf32> to vector<64x16xf32>
    %46 = arith.addf %43, %45 : vector<64x16xf32>
    %c32 = arith.constant 32 : index
    %c0_21 = arith.constant 0 : index
    %47 = vector.load %arg4[%c32, %c0_21] : memref<48x16xf32, #tpu.memory_space<vmem>>, vector<16x16xf32>
    %cst_22 = arith.constant dense<0.000000e+00> : vector<64x16xf32>
    %48 = tpu.matmul %46, %47, %cst_22 {dimension_numbers = #tpu.dot_dimension_numbers<[1], [0], [0], [1], [0, 0, 1, 1], [], []>} : vector<64x16xf32>, vector<16x16xf32>, vector<64x16xf32> -> vector<64x16xf32>
    %49 = vector.extract_strided_slice %35 {offsets = [0, 32], sizes = [1, 16], strides = [1, 1]} : vector<1x48xf32> to vector<1x16xf32>
    %50 = vector.broadcast %49 : vector<1x16xf32> to vector<64x16xf32>
    %51 = arith.addf %48, %50 : vector<64x16xf32>
    %52 = arith.addf %41, %51 : vector<64x16xf32>
    %c0_23 = arith.constant 0 : index
    %c0_24 = arith.constant 0 : index
    %53 = vector.load %arg8[%c0_23, %c0_24] : memref<64x16xf32, #tpu.memory_space<vmem>>, vector<64x16xf32>
    tpu.vector_store %arg8[%c0_23, %c0_24], %52 {strides = array<i32>} : memref<64x16xf32, #tpu.memory_space<vmem>>, vector<64x16xf32>,
    return
  }
  func.func @transform_0(%arg0: i32) -> (i32, i32) {
    %c0_i32 = arith.constant 0 : i32
    %c0_i32_0 = arith.constant 0 : i32
    return %arg0, %c0_i32 : i32, i32
  }
  func.func @transform_1(%arg0: i32) -> (i32, i32) {
    %c0_i32 = arith.constant 0 : i32
    %c0_i32_0 = arith.constant 0 : i32
    %c0_i32_1 = arith.constant 0 : i32
    return %c0_i32, %c0_i32_0 : i32, i32
  }
  func.func @transform_2(%arg0: i32) -> (i32, i32) {
    %c0_i32 = arith.constant 0 : i32
    %c0_i32_0 = arith.constant 0 : i32
    %c0_i32_1 = arith.constant 0 : i32
    return %c0_i32, %c0_i32_0 : i32, i32
  }
  func.func @transform_3(%arg0: i32) -> (i32, i32) {
    %c0_i32 = arith.constant 0 : i32
    %c0_i32_0 = arith.constant 0 : i32
    %c0_i32_1 = arith.constant 0 : i32
    return %c0_i32, %c0_i32_0 : i32, i32
  }
  func.func @transform_4(%arg0: i32) -> (i32, i32) {
    %c0_i32 = arith.constant 0 : i32
    %c0_i32_0 = arith.constant 0 : i32
    %c0_i32_1 = arith.constant 0 : i32
    return %c0_i32, %c0_i32_0 : i32, i32
  }
  func.func @transform_5(%arg0: i32) -> (i32, i32) {
    %c0_i32 = arith.constant 0 : i32
    %c0_i32_0 = arith.constant 0 : i32
    %c0_i32_1 = arith.constant 0 : i32
    return %c0_i32, %c0_i32_0 : i32, i32
  }
  func.func @transform_6(%arg0: i32) -> (i32, i32) {
    %c0_i32 = arith.constant 0 : i32
    %c0_i32_0 = arith.constant 0 : i32
    %c0_i32_1 = arith.constant 0 : i32
    return %c0_i32, %c0_i32_0 : i32, i32
  }
  func.func @transform_7(%arg0: i32) -> (i32, i32) {
    %c0_i32 = arith.constant 0 : i32
    %c0_i32_0 = arith.constant 0 : i32
    return %arg0, %c0_i32 : i32, i32
  }
}

</mosaic_0001>

<llo_original>
// kernel: tpu_custom_call.1
$region0: #{tpu_custom_call.1}
  #allocation0 [shape = 'u32[]', space=smem, size = 0x4, offset = 0x4, fixed_abs, tag = 'smem constant byte address 0x4 - core index']
  #allocation1 [shape = 'u32[144,128]{1,0:T(1,128)}', space=vmem, size = 0x12000, scoped, tag = 'internal scratch']
  %s0 = inlined_call_operand.vmem [shape: f32[64,16], index: 0, kind: input, shape index: {}]
  %s1 = inlined_call_operand.vmem [shape: f32[16,48], index: 1, kind: input, shape index: {}]
  %s2 = inlined_call_operand.vmem [shape: f32[1,48], index: 2, kind: input, shape index: {}]
  %s3 = inlined_call_operand.vmem [shape: f32[48,16], index: 3, kind: input, shape index: {}]
  %s4 = inlined_call_operand.vmem [shape: f32[1,48], index: 4, kind: input, shape index: {}]
  %s5 = inlined_call_operand.vmem [shape: f32[256,16], index: 5, kind: input, shape index: {}]
  %s6 = inlined_call_operand.vmem [shape: f32[256,64], index: 6, kind: input, shape index: {}]
  %s7 = inlined_call_operand.vmem [shape: f32[64,16], index: 7, kind: output, shape index: {}]
  %s8 = sld [smem:[#allocation0]]
  $region38: #{tpu_custom_call.1} parent=0
    _
  %s10 = ssub.s32 1, %s8
  %s11 = scalar_select 0, %s10, %s8
  // Predicated region
  $region2: #{tpu_custom_call.1} parent=0 // pred_check
    _
  $region3: #{tpu_custom_call.1} parent=0 // pred_check_branch
    %13 = sbr.rel (0) target = $region5
  $region4: #{tpu_custom_call.1} parent=0 // pred_region
    _
  $region5: #{tpu_custom_call.1} parent=0 // pred_fallthru
    _
  // Predicated region
  $region6: #{tpu_custom_call.1} parent=0 // pred_check
    _
  $region7: #{tpu_custom_call.1} parent=0 // pred_check_branch
    %15 = sbr.rel (0) target = $region9
  $region8: #{tpu_custom_call.1} parent=0 // pred_region
    _
  $region9: #{tpu_custom_call.1} parent=0 // pred_fallthru
    _
  // Predicated region
  $region10: #{tpu_custom_call.1} parent=0 // pred_check
    _
  $region11: #{tpu_custom_call.1} parent=0 // pred_check_branch
    %17 = sbr.rel (0) target = $region13
  $region12: #{tpu_custom_call.1} parent=0 // pred_region
    _
  $region13: #{tpu_custom_call.1} parent=0 // pred_fallthru
    _
  // Predicated region
  $region14: #{tpu_custom_call.1} parent=0 // pred_check
    _
  $region15: #{tpu_custom_call.1} parent=0 // pred_check_branch
    %19 = sbr.rel (0) target = $region17
  $region16: #{tpu_custom_call.1} parent=0 // pred_region
    _
  $region17: #{tpu_custom_call.1} parent=0 // pred_fallthru
    _
  // Predicated region
  $region18: #{tpu_custom_call.1} parent=0 // pred_check
    _
  $region19: #{tpu_custom_call.1} parent=0 // pred_check_branch
    %21 = sbr.rel (0) target = $region21
  $region20: #{tpu_custom_call.1} parent=0 // pred_region
    _
  $region21: #{tpu_custom_call.1} parent=0 // pred_fallthru
    _
  // Predicated region
  $region22: #{tpu_custom_call.1} parent=0 // pred_check
    _
  $region23: #{tpu_custom_call.1} parent=0 // pred_check_branch
    %23 = sbr.rel (0) target = $region25
  $region24: #{tpu_custom_call.1} parent=0 // pred_region
    _
  $region25: #{tpu_custom_call.1} parent=0 // pred_fallthru
    _
  // Predicated region
  $region26: #{tpu_custom_call.1} parent=0 // pred_check
    _
  $region27: #{tpu_custom_call.1} parent=0 // pred_check_branch
    %25 = sbr.rel (0) target = $region29
  $region28: #{tpu_custom_call.1} parent=0 // pred_region
    _
  $region29: #{tpu_custom_call.1} parent=0 // pred_fallthru
    _
  %v26 = vld [vmem:[%s0] sm:$0xff]
  %v27 = vld [vmem:[%s0 + $0x8] sm:$0xff]
  %v28 = vld [vmem:[%s0 + $0x10] sm:$0xff]
  %v29 = vld [vmem:[%s0 + $0x18] sm:$0xff]
  %v30 = vld [vmem:[%s0 + $0x20] sm:$0xff]
  %v31 = vld [vmem:[%s0 + $0x28] sm:$0xff]
  %v32 = vld [vmem:[%s0 + $0x30] sm:$0xff]
  %v33 = vld [vmem:[%s0 + $0x38] sm:$0xff]
  %v34 = vld [vmem:[%s1] sm:$0xff]
  %v35 = vld [vmem:[%s1 + $0x8] sm:$0xff]
  %v36 = vld [vmem:[%s2] sm:$0x1]
  %v38 = vlaneseq
  %v39 = vshrl.u32 %v38, 7
  %v40 = vsub.s32 0, %v39
  %v41 = vrot.slane %v36, %v40
  %vm43 = vcmask 130048
  %v45 = vsel %vm43, %v26, 0
  %v48 = vsel %vm43, %v27, 0
  %v51 = vsel %vm43, %v28, 0
  %v54 = vsel %vm43, %v29, 0
  %v57 = vsel %vm43, %v30, 0
  %v60 = vsel %vm43, %v31, 0
  %v63 = vsel %vm43, %v32, 0
  %v66 = vsel %vm43, %v33, 0
  %68 = vmatprep.subr.mxu0 0.0
  %69 = vmatpush1.msra.mxu0 %v34
  %70 = vmatprep.subr.mxu0 0.0
  %71 = vmatpush1.msra.mxu0 %v35
  %72 = vmatprep.subr.mxu0 0.0
  %73 = vmatpush1.msra.mxu0 0.0
  %74 = vmatprep.subr.mxu0 0.0
  %75 = vmatpush1.msra.mxu0 0.0
  %76 = vmatprep.subr.mxu0 0.0
  %77 = vmatpush1.msra.mxu0 0.0
  %78 = vmatprep.subr.mxu0 0.0
  %79 = vmatpush1.msra.mxu0 0.0
  %80 = vmatprep.subr.mxu0 0.0
  %81 = vmatpush1.msra.mxu0 0.0
  %82 = vmatprep.subr.mxu0 0.0
  %83 = vmatpush1.msra.mxu0 0.0
  %84 = vmatprep.subr.mxu0 0.0
  %85 = vmatpush1.msra.mxu0 0.0
  %86 = vmatprep.subr.mxu0 0.0
  %87 = vmatpush1.msra.mxu0 0.0
  %88 = vmatprep.subr.mxu0 0.0
  %89 = vmatpush1.msra.mxu0 0.0
  %90 = vmatprep.subr.mxu0 0.0
  %91 = vmatpush1.msra.mxu0 0.0
  %92 = vmatprep.subr.mxu0 0.0
  %93 = vmatpush1.msra.mxu0 0.0
  %94 = vmatprep.subr.mxu0 0.0
  %95 = vmatpush1.msra.mxu0 0.0
  %96 = vmatprep.subr.mxu0 0.0
  %97 = vmatpush1.msra.mxu0 0.0
  %98 = vmatprep.subr.mxu0 0.0
  %99 = vmatpush1.msra.mxu0 0.0
  %100 = vmatprep.subr.mxu0 0.0
  %101 = vmatpush1.msra.mxu0 0.0
  %102 = vmatprep.subr.mxu0 0.0
  %103 = vmatpush1.msra.mxu0 0.0
  %104 = vmatprep.subr.mxu0 0.0
  %105 = vmatpush1.msra.mxu0 0.0
  %106 = vmatprep.subr.mxu0 0.0
  %107 = vmatpush1.msra.mxu0 0.0
  %108 = vmatprep.subr.mxu0 0.0
  %109 = vmatpush1.msra.mxu0 0.0
  %110 = vmatprep.subr.mxu0 0.0
  %111 = vmatpush1.msra.mxu0 0.0
  %112 = vmatprep.subr.mxu0 0.0
  %113 = vmatpush1.msra.mxu0 0.0
  %114 = vmatprep.subr.mxu0 0.0
  %115 = vmatpush1.msra.mxu0 0.0
  %116 = vmatprep.subr.mxu0 0.0
  %117 = vmatpush1.msra.mxu0 0.0
  %118 = vmatprep.subr.mxu0 0.0
  %119 = vmatpush1.msra.mxu0 0.0
  %120 = vmatprep.subr.mxu0 0.0
  %121 = vmatpush1.msra.mxu0 0.0
  %122 = vmatprep.subr.mxu0 0.0
  %123 = vmatpush1.msra.mxu0 0.0
  %124 = vmatprep.subr.mxu0 0.0
  %125 = vmatpush1.msra.mxu0 0.0
  %126 = vmatprep.subr.mxu0 0.0
  %127 = vmatpush1.msra.mxu0 0.0
  %128 = vmatprep.subr.mxu0 0.0
  %129 = vmatpush1.msra.mxu0 0.0
  %130 = vmatprep.subr.mxu0 0.0
  %131 = vmatpush1.msra.mxu0 0.0
  %132 = vmatprep.mubr.f32.mxu0 0.0
  %133 = vmatmul.mubr.f32.gmra.mrb[0].mxu0 %v45
  %v134 = vpop.f32.mrb[0].mxu0
  %v135 = vadd.f32 %v41, %v134
  %v136 = vpop.f32.mrb[0].mxu0
  %137 = vmatprep.mubr.f32.mxu0 0.0
  %138 = vmatmul.mubr.f32.gmra.mrb[0].mxu0 %v48
  %v139 = vpop.f32.mrb[0].mxu0
  %v140 = vadd.f32 %v41, %v139
  %v141 = vpop.f32.mrb[0].mxu0
  %142 = vmatprep.mubr.f32.mxu0 0.0
  %143 = vmatmul.mubr.f32.gmra.mrb[0].mxu0 %v51
  %v144 = vpop.f32.mrb[0].mxu0
  %v145 = vadd.f32 %v41, %v144
  %v146 = vpop.f32.mrb[0].mxu0
  %147 = vmatprep.mubr.f32.mxu0 0.0
  %148 = vmatmul.mubr.f32.gmra.mrb[0].mxu0 %v54
  %v149 = vpop.f32.mrb[0].mxu0
  %v150 = vadd.f32 %v41, %v149
  %v151 = vpop.f32.mrb[0].mxu0
  %152 = vmatprep.mubr.f32.mxu0 0.0
  %153 = vmatmul.mubr.f32.gmra.mrb[0].mxu0 %v57
  %v154 = vpop.f32.mrb[0].mxu0
  %v155 = vadd.f32 %v41, %v154
  %v156 = vpop.f32.mrb[0].mxu0
  %157 = vmatprep.mubr.f32.mxu0 0.0
  %158 = vmatmul.mubr.f32.gmra.mrb[0].mxu0 %v60
  %v159 = vpop.f32.mrb[0].mxu0
  %v160 = vadd.f32 %v41, %v159
  %v161 = vpop.f32.mrb[0].mxu0
  %162 = vmatprep.mubr.f32.mxu0 0.0
  %163 = vmatmul.mubr.f32.gmra.mrb[0].mxu0 %v63
  %v164 = vpop.f32.mrb[0].mxu0
  %v165 = vadd.f32 %v41, %v164
  %v166 = vpop.f32.mrb[0].mxu0
  %167 = vmatprep.mubr.f32.mxu0 0.0
  %168 = vmatmul.mubr.f32.gmra.mrb[0].mxu0 %v66
  %v169 = vpop.f32.mrb[0].mxu0
  %v170 = vadd.f32 %v41, %v169
  %v171 = vpop.f32.mrb[0].mxu0
  %172 = vdwg.mxu0
  %v173 = vld [vmem:[%s5] sm:$0xff]
  %v174 = vld [vmem:[%s5 + $0x8] sm:$0xff]
  %v175 = vld [vmem:[%s5 + $0x10] sm:$0xff]
  %v176 = vld [vmem:[%s5 + $0x18] sm:$0xff]
  %v177 = vld [vmem:[%s5 + $0x20] sm:$0xff]
  %v178 = vld [vmem:[%s5 + $0x28] sm:$0xff]
  %v179 = vld [vmem:[%s5 + $0x30] sm:$0xff]
  %v180 = vld [vmem:[%s5 + $0x38] sm:$0xff]
  %v181 = vld [vmem:[%s5 + $0x40] sm:$0xff]
  %v182 = vld [vmem:[%s5 + $0x48] sm:$0xff]
  %v183 = vld [vmem:[%s5 + $0x50] sm:$0xff]
  %v184 = vld [vmem:[%s5 + $0x58] sm:$0xff]
  %v185 = vld [vmem:[%s5 + $0x60] sm:$0xff]
  %v186 = vld [vmem:[%s5 + $0x68] sm:$0xff]
  %v187 = vld [vmem:[%s5 + $0x70] sm:$0xff]
  %v188 = vld [vmem:[%s5 + $0x78] sm:$0xff]
  %v189 = vld [vmem:[%s5 + $0x80] sm:$0xff]
  %v190 = vld [vmem:[%s5 + $0x88] sm:$0xff]
  %v191 = vld [vmem:[%s5 + $0x90] sm:$0xff]
  %v192 = vld [vmem:[%s5 + $0x98] sm:$0xff]
  %v193 = vld [vmem:[%s5 + $0xa0] sm:$0xff]
  %v194 = vld [vmem:[%s5 + $0xa8] sm:$0xff]
  %v195 = vld [vmem:[%s5 + $0xb0] sm:$0xff]
  %v196 = vld [vmem:[%s5 + $0xb8] sm:$0xff]
  %v197 = vld [vmem:[%s5 + $0xc0] sm:$0xff]
  %v198 = vld [vmem:[%s5 + $0xc8] sm:$0xff]
  %v199 = vld [vmem:[%s5 + $0xd0] sm:$0xff]
  %v200 = vld [vmem:[%s5 + $0xd8] sm:$0xff]
  %v201 = vld [vmem:[%s5 + $0xe0] sm:$0xff]
  %v202 = vld [vmem:[%s5 + $0xe8] sm:$0xff]
  %v203 = vld [vmem:[%s5 + $0xf0] sm:$0xff]
  %v204 = vld [vmem:[%s5 + $0xf8] sm:$0xff]
  %v205 = vmul.f32 %v135, %v173
  %v206 = vmul.f32 %v140, %v174
  %v207 = vmul.f32 %v145, %v175
  %v208 = vmul.f32 %v150, %v176
  %v209 = vmul.f32 %v155, %v177
  %v210 = vmul.f32 %v160, %v178
  %v211 = vmul.f32 %v165, %v179
  %v212 = vmul.f32 %v170, %v180
  %v213 = vmul.f32 %v135, %v181
  %v214 = vmul.f32 %v140, %v182
  %v215 = vmul.f32 %v145, %v183
  %v216 = vmul.f32 %v150, %v184
  %v217 = vmul.f32 %v155, %v185
  %v218 = vmul.f32 %v160, %v186
  %v219 = vmul.f32 %v165, %v187
  %v220 = vmul.f32 %v170, %v188
  %v221 = vmul.f32 %v135, %v189
  %v222 = vmul.f32 %v140, %v190
  %v223 = vmul.f32 %v145, %v191
  %v224 = vmul.f32 %v150, %v192
  %v225 = vmul.f32 %v155, %v193
  %v226 = vmul.f32 %v160, %v194
  %v227 = vmul.f32 %v165, %v195
  %v228 = vmul.f32 %v170, %v196
  %v229 = vmul.f32 %v135, %v197
  %v230 = vmul.f32 %v140, %v198
  %v231 = vmul.f32 %v145, %v199
  %v232 = vmul.f32 %v150, %v200
  %v233 = vmul.f32 %v155, %v201
  %v234 = vmul.f32 %v160, %v202
  %v235 = vmul.f32 %v165, %v203
  %v236 = vmul.f32 %v170, %v204
  %245 = vrot.lane.b32.xlu0 %v135, 112
  %v246 = vpop.permute.xlu0 %245
  %247 = vrot.lane.b32.xlu0 %v140, 112
  %v248 = vpop.permute.xlu0 %247
  %249 = vrot.lane.b32.xlu0 %v145, 112
  %v250 = vpop.permute.xlu0 %249
  %251 = vrot.lane.b32.xlu0 %v150, 112
  %v252 = vpop.permute.xlu0 %251
  %253 = vrot.lane.b32.xlu0 %v155, 112
  %v254 = vpop.permute.xlu0 %253
  %255 = vrot.lane.b32.xlu0 %v160, 112
  %v256 = vpop.permute.xlu0 %255
  %257 = vrot.lane.b32.xlu0 %v165, 112
  %v258 = vpop.permute.xlu0 %257
  %259 = vrot.lane.b32.xlu0 %v170, 112
  %v260 = vpop.permute.xlu0 %259
  %v262 = vsel %vm43, %v205, 0
  %v265 = vsel %vm43, %v206, 0
  %v268 = vsel %vm43, %v207, 0
  %v271 = vsel %vm43, %v208, 0
  %v274 = vsel %vm43, %v209, 0
  %v277 = vsel %vm43, %v210, 0
  %v280 = vsel %vm43, %v211, 0
  %v283 = vsel %vm43, %v212, 0
  %v286 = vsel %vm43, %v213, 0
  %v289 = vsel %vm43, %v214, 0
  %v292 = vsel %vm43, %v215, 0
  %v295 = vsel %vm43, %v216, 0
  %v298 = vsel %vm43, %v217, 0
  %v301 = vsel %vm43, %v218, 0
  %v304 = vsel %vm43, %v219, 0
  %v307 = vsel %vm43, %v220, 0
  %v310 = vsel %vm43, %v221, 0
  %v313 = vsel %vm43, %v222, 0
  %v316 = vsel %vm43, %v223, 0
  %v319 = vsel %vm43, %v224, 0
  %v322 = vsel %vm43, %v225, 0
  %v325 = vsel %vm43, %v226, 0
  %v328 = vsel %vm43, %v227, 0
  %v331 = vsel %vm43, %v228, 0
  %v334 = vsel %vm43, %v229, 0
  %v337 = vsel %vm43, %v230, 0
  %v340 = vsel %vm43, %v231, 0
  %v343 = vsel %vm43, %v232, 0
  %v346 = vsel %vm43, %v233, 0
  %v349 = vsel %vm43, %v234, 0
  %v352 = vsel %vm43, %v235, 0
  %v355 = vsel %vm43, %v236, 0
  %v357 = vsel %vm43, %v246, 0
  %v359 = vsel %vm43, %v248, 0
  %v361 = vsel %vm43, %v250, 0
  %v363 = vsel %vm43, %v252, 0
  %v365 = vsel %vm43, %v254, 0
  %v367 = vsel %vm43, %v256, 0
  %v369 = vsel %vm43, %v258, 0
  %v371 = vsel %vm43, %v260, 0
  %373 = vmatprep.subr.mxu0 0.0
  %374 = vmatpush1.xpose.msra.mxu0 %v357
  %375 = vmatprep.subr.mxu0 0.0
  %376 = vmatpush1.xpose.msra.mxu0 %v359
  %377 = vmatprep.subr.mxu0 0.0
  %378 = vmatpush1.xpose.msra.mxu0 %v361
  %379 = vmatprep.subr.mxu0 0.0
  %380 = vmatpush1.xpose.msra.mxu0 %v363
  %381 = vmatprep.subr.mxu0 0.0
  %382 = vmatpush1.xpose.msra.mxu0 %v365
  %383 = vmatprep.subr.mxu0 0.0
  %384 = vmatpush1.xpose.msra.mxu0 %v367
  %385 = vmatprep.subr.mxu0 0.0
  %386 = vmatpush1.xpose.msra.mxu0 %v369
  %387 = vmatprep.subr.mxu0 0.0
  %388 = vmatpush1.xpose.msra.mxu0 %v371
  %389 = vmatprep.subr.mxu0 0.0
  %390 = vmatpush1.xpose.msra.mxu0 0.0
  %391 = vmatprep.subr.mxu0 0.0
  %392 = vmatpush1.xpose.msra.mxu0 0.0
  %393 = vmatprep.subr.mxu0 0.0
  %394 = vmatpush1.xpose.msra.mxu0 0.0
  %395 = vmatprep.subr.mxu0 0.0
  %396 = vmatpush1.xpose.msra.mxu0 0.0
  %397 = vmatprep.subr.mxu0 0.0
  %398 = vmatpush1.xpose.msra.mxu0 0.0
  %399 = vmatprep.subr.mxu0 0.0
  %400 = vmatpush1.xpose.msra.mxu0 0.0
  %401 = vmatprep.subr.mxu0 0.0
  %402 = vmatpush1.xpose.msra.mxu0 0.0
  %403 = vmatprep.subr.mxu0 0.0
  %404 = vmatpush1.xpose.msra.mxu0 0.0
  %405 = vmatprep.subr.mxu0 0.0
  %406 = vmatpush1.xpose.msra.mxu0 0.0
  %407 = vmatprep.subr.mxu0 0.0
  %408 = vmatpush1.xpose.msra.mxu0 0.0
  %409 = vmatprep.subr.mxu0 0.0
  %410 = vmatpush1.xpose.msra.mxu0 0.0
  %411 = vmatprep.subr.mxu0 0.0
  %412 = vmatpush1.xpose.msra.mxu0 0.0
  %413 = vmatprep.subr.mxu0 0.0
  %414 = vmatpush1.xpose.msra.mxu0 0.0
  %415 = vmatprep.subr.mxu0 0.0
  %416 = vmatpush1.xpose.msra.mxu0 0.0
  %417 = vmatprep.subr.mxu0 0.0
  %418 = vmatpush1.xpose.msra.mxu0 0.0
  %419 = vmatprep.subr.mxu0 0.0
  %420 = vmatpush1.xpose.msra.mxu0 0.0
  %421 = vmatprep.subr.mxu0 0.0
  %422 = vmatpush1.xpose.msra.mxu0 0.0
  %423 = vmatprep.subr.mxu0 0.0
  %424 = vmatpush1.xpose.msra.mxu0 0.0
  %425 = vmatprep.subr.mxu0 0.0
  %426 = vmatpush1.xpose.msra.mxu0 0.0
  %427 = vmatprep.subr.mxu0 0.0
  %428 = vmatpush1.xpose.msra.mxu0 0.0
  %429 = vmatprep.subr.mxu0 0.0
  %430 = vmatpush1.xpose.msra.mxu0 0.0
  %431 = vmatprep.subr.mxu0 0.0
  %432 = vmatpush1.xpose.msra.mxu0 0.0
  %433 = vmatprep.subr.mxu0 0.0
  %434 = vmatpush1.xpose.msra.mxu0 0.0
  %435 = vmatprep.subr.mxu0 0.0
  %436 = vmatpush1.xpose.msra.mxu0 0.0
  %437 = vmatprep.mubr.f32.mxu0 0.0
  %438 = vmatmul.mubr.f32.gmra.mrb[0].mxu0 %v262
  %v439 = vpop.f32.mrb[0].mxu0
  %v440 = vadd.f32 0.0, %v439
  %v441 = vpop.f32.mrb[0].mxu0
  %442 = vmatprep.mubr.f32.mxu0 0.0
  %443 = vmatmul.mubr.f32.gmra.mrb[0].mxu0 %v265
  %v444 = vpop.f32.mrb[0].mxu0
  %v445 = vadd.f32 0.0, %v444
  %v446 = vpop.f32.mrb[0].mxu0
  %447 = vmatprep.mubr.f32.mxu0 0.0
  %448 = vmatmul.mubr.f32.gmra.mrb[0].mxu0 %v268
  %v449 = vpop.f32.mrb[0].mxu0
  %v450 = vadd.f32 0.0, %v449
  %v451 = vpop.f32.mrb[0].mxu0
  %452 = vmatprep.mubr.f32.mxu0 0.0
  %453 = vmatmul.mubr.f32.gmra.mrb[0].mxu0 %v271
  %v454 = vpop.f32.mrb[0].mxu0
  %v455 = vadd.f32 0.0, %v454
  %v456 = vpop.f32.mrb[0].mxu0
  %457 = vmatprep.mubr.f32.mxu0 0.0
  %458 = vmatmul.mubr.f32.gmra.mrb[0].mxu0 %v274
  %v459 = vpop.f32.mrb[0].mxu0
  %v460 = vadd.f32 0.0, %v459
  %v461 = vpop.f32.mrb[0].mxu0
  %462 = vmatprep.mubr.f32.mxu0 0.0
  %463 = vmatmul.mubr.f32.gmra.mrb[0].mxu0 %v277
  %v464 = vpop.f32.mrb[0].mxu0
  %v465 = vadd.f32 0.0, %v464
  %v466 = vpop.f32.mrb[0].mxu0
  %467 = vmatprep.mubr.f32.mxu0 0.0
  %468 = vmatmul.mubr.f32.gmra.mrb[0].mxu0 %v280
  %v469 = vpop.f32.mrb[0].mxu0
  %v470 = vadd.f32 0.0, %v469
  %v471 = vpop.f32.mrb[0].mxu0
  %472 = vmatprep.mubr.f32.mxu0 0.0
  %473 = vmatmul.mubr.f32.gmra.mrb[0].mxu0 %v283
  %v474 = vpop.f32.mrb[0].mxu0
  %v475 = vadd.f32 0.0, %v474
  %v476 = vpop.f32.mrb[0].mxu0
  %477 = vmatprep.mubr.f32.mxu0 0.0
  %478 = vmatmul.mubr.f32.gmra.mrb[0].mxu0 %v286
  %v479 = vpop.f32.mrb[0].mxu0
  %v480 = vadd.f32 0.0, %v479
  %v481 = vpop.f32.mrb[0].mxu0
  %482 = vmatprep.mubr.f32.mxu0 0.0
  %483 = vmatmul.mubr.f32.gmra.mrb[0].mxu0 %v289
  %v484 = vpop.f32.mrb[0].mxu0
  %v485 = vadd.f32 0.0, %v484
  %v486 = vpop.f32.mrb[0].mxu0
  %487 = vmatprep.mubr.f32.mxu0 0.0
  %488 = vmatmul.mubr.f32.gmra.mrb[0].mxu0 %v292
  %v489 = vpop.f32.mrb[0].mxu0
  %v490 = vadd.f32 0.0, %v489
  %v491 = vpop.f32.mrb[0].mxu0
  %492 = vmatprep.mubr.f32.mxu0 0.0
  %493 = vmatmul.mubr.f32.gmra.mrb[0].mxu0 %v295
  %v494 = vpop.f32.mrb[0].mxu0
  %v495 = vadd.f32 0.0, %v494
  %v496 = vpop.f32.mrb[0].mxu0
  %497 = vmatprep.mubr.f32.mxu0 0.0
  %498 = vmatmul.mubr.f32.gmra.mrb[0].mxu0 %v298
  %v499 = vpop.f32.mrb[0].mxu0
  %v500 = vadd.f32 0.0, %v499
  %v501 = vpop.f32.mrb[0].mxu0
  %502 = vmatprep.mubr.f32.mxu0 0.0
  %503 = vmatmul.mubr.f32.gmra.mrb[0].mxu0 %v301
  %v504 = vpop.f32.mrb[0].mxu0
  %v505 = vadd.f32 0.0, %v504
  %v506 = vpop.f32.mrb[0].mxu0
  %507 = vmatprep.mubr.f32.mxu0 0.0
  %508 = vmatmul.mubr.f32.gmra.mrb[0].mxu0 %v304
  %v509 = vpop.f32.mrb[0].mxu0
  %v510 = vadd.f32 0.0, %v509
  %v511 = vpop.f32.mrb[0].mxu0
  %512 = vmatprep.mubr.f32.mxu0 0.0
  %513 = vmatmul.mubr.f32.gmra.mrb[0].mxu0 %v307
  %v514 = vpop.f32.mrb[0].mxu0
  %v515 = vadd.f32 0.0, %v514
  %v516 = vpop.f32.mrb[0].mxu0
  %517 = vmatprep.mubr.f32.mxu0 0.0
  %518 = vmatmul.mubr.f32.gmra.mrb[0].mxu0 %v310
  %v519 = vpop.f32.mrb[0].mxu0
  %v520 = vadd.f32 0.0, %v519
  %v521 = vpop.f32.mrb[0].mxu0
  %522 = vmatprep.mubr.f32.mxu0 0.0
  %523 = vmatmul.mubr.f32.gmra.mrb[0].mxu0 %v313
  %v524 = vpop.f32.mrb[0].mxu0
  %v525 = vadd.f32 0.0, %v524
  %v526 = vpop.f32.mrb[0].mxu0
  %527 = vmatprep.mubr.f32.mxu0 0.0
  %528 = vmatmul.mubr.f32.gmra.mrb[0].mxu0 %v316
  %v529 = vpop.f32.mrb[0].mxu0
  %v530 = vadd.f32 0.0, %v529
  %v531 = vpop.f32.mrb[0].mxu0
  %532 = vmatprep.mubr.f32.mxu0 0.0
  %533 = vmatmul.mubr.f32.gmra.mrb[0].mxu0 %v319
  %v534 = vpop.f32.mrb[0].mxu0
  %v535 = vadd.f32 0.0, %v534
  %v536 = vpop.f32.mrb[0].mxu0
  %537 = vmatprep.mubr.f32.mxu0 0.0
  %538 = vmatmul.mubr.f32.gmra.mrb[0].mxu0 %v322
  %v539 = vpop.f32.mrb[0].mxu0
  %v540 = vadd.f32 0.0, %v539
  %v541 = vpop.f32.mrb[0].mxu0
  %542 = vmatprep.mubr.f32.mxu0 0.0
  %543 = vmatmul.mubr.f32.gmra.mrb[0].mxu0 %v325
  %v544 = vpop.f32.mrb[0].mxu0
  %v545 = vadd.f32 0.0, %v544
  %v546 = vpop.f32.mrb[0].mxu0
  %547 = vmatprep.mubr.f32.mxu0 0.0
  %548 = vmatmul.mubr.f32.gmra.mrb[0].mxu0 %v328
  %v549 = vpop.f32.mrb[0].mxu0
  %v550 = vadd.f32 0.0, %v549
  %v551 = vpop.f32.mrb[0].mxu0
  %552 = vmatprep.mubr.f32.mxu0 0.0
  %553 = vmatmul.mubr.f32.gmra.mrb[0].mxu0 %v331
  %v554 = vpop.f32.mrb[0].mxu0
  %v555 = vadd.f32 0.0, %v554
  %v556 = vpop.f32.mrb[0].mxu0
  %557 = vmatprep.mubr.f32.mxu0 0.0
  %558 = vmatmul.mubr.f32.gmra.mrb[0].mxu0 %v334
  %v559 = vpop.f32.mrb[0].mxu0
  %v560 = vadd.f32 0.0, %v559
  %v561 = vpop.f32.mrb[0].mxu0
  %562 = vmatprep.mubr.f32.mxu0 0.0
  %563 = vmatmul.mubr.f32.gmra.mrb[0].mxu0 %v337
  %v564 = vpop.f32.mrb[0].mxu0
  %v565 = vadd.f32 0.0, %v564
  %v566 = vpop.f32.mrb[0].mxu0
  %567 = vmatprep.mubr.f32.mxu0 0.0
  %568 = vmatmul.mubr.f32.gmra.mrb[0].mxu0 %v340
  %v569 = vpop.f32.mrb[0].mxu0
  %v570 = vadd.f32 0.0, %v569
  %v571 = vpop.f32.mrb[0].mxu0
  %572 = vmatprep.mubr.f32.mxu0 0.0
  %573 = vmatmul.mubr.f32.gmra.mrb[0].mxu0 %v343
  %v574 = vpop.f32.mrb[0].mxu0
  %v575 = vadd.f32 0.0, %v574
  %v576 = vpop.f32.mrb[0].mxu0
  %577 = vmatprep.mubr.f32.mxu0 0.0
  %578 = vmatmul.mubr.f32.gmra.mrb[0].mxu0 %v346
  %v579 = vpop.f32.mrb[0].mxu0
  %v580 = vadd.f32 0.0, %v579
  %v581 = vpop.f32.mrb[0].mxu0
  %582 = vmatprep.mubr.f32.mxu0 0.0
  %583 = vmatmul.mubr.f32.gmra.mrb[0].mxu0 %v349
  %v584 = vpop.f32.mrb[0].mxu0
  %v585 = vadd.f32 0.0, %v584
  %v586 = vpop.f32.mrb[0].mxu0
  %587 = vmatprep.mubr.f32.mxu0 0.0
  %588 = vmatmul.mubr.f32.gmra.mrb[0].mxu0 %v352
  %v589 = vpop.f32.mrb[0].mxu0
  %v590 = vadd.f32 0.0, %v589
  %v591 = vpop.f32.mrb[0].mxu0
  %592 = vmatprep.mubr.f32.mxu0 0.0
  %593 = vmatmul.mubr.f32.gmra.mrb[0].mxu0 %v355
  %v594 = vpop.f32.mrb[0].mxu0
  %v595 = vadd.f32 0.0, %v594
  %v596 = vpop.f32.mrb[0].mxu0
  %597 = vdwg.mxu0
  %v598 = vmul.f32 %v440, 0.5
  %v599 = vmul.f32 %v445, 0.5
  %v600 = vmul.f32 %v450, 0.5
  %v601 = vmul.f32 %v455, 0.5
  %v602 = vmul.f32 %v460, 0.5
  %v603 = vmul.f32 %v465, 0.5
  %v604 = vmul.f32 %v470, 0.5
  %v605 = vmul.f32 %v475, 0.5
  %v606 = vmul.f32 %v480, 0.5
  %v607 = vmul.f32 %v485, 0.5
  %v608 = vmul.f32 %v490, 0.5
  %v609 = vmul.f32 %v495, 0.5
  %v610 = vmul.f32 %v500, 0.5
  %v611 = vmul.f32 %v505, 0.5
  %v612 = vmul.f32 %v510, 0.5
  %v613 = vmul.f32 %v515, 0.5
  %v614 = vmul.f32 %v520, 0.5
  %v615 = vmul.f32 %v525, 0.5
  %v616 = vmul.f32 %v530, 0.5
  %v617 = vmul.f32 %v535, 0.5
  %v618 = vmul.f32 %v540, 0.5
  %v619 = vmul.f32 %v545, 0.5
  %v620 = vmul.f32 %v550, 0.5
  %v621 = vmul.f32 %v555, 0.5
  %v622 = vmul.f32 %v560, 0.5
  %v623 = vmul.f32 %v565, 0.5
  %v624 = vmul.f32 %v570, 0.5
  %v625 = vmul.f32 %v575, 0.5
  %v626 = vmul.f32 %v580, 0.5
  %v627 = vmul.f32 %v585, 0.5
  %v628 = vmul.f32 %v590, 0.5
  %v629 = vmul.f32 %v595, 0.5
  %v630 = vld [vmem:[%s6] sm:$0xff]
  %v631 = vld [vmem:[%s6 + $0x8] sm:$0xff]
  %v632 = vld [vmem:[%s6 + $0x10] sm:$0xff]
  %v633 = vld [vmem:[%s6 + $0x18] sm:$0xff]
  %v634 = vld [vmem:[%s6 + $0x20] sm:$0xff]
  %v635 = vld [vmem:[%s6 + $0x28] sm:$0xff]
  %v636 = vld [vmem:[%s6 + $0x30] sm:$0xff]
  %v637 = vld [vmem:[%s6 + $0x38] sm:$0xff]
  %v638 = vld [vmem:[%s6 + $0x40] sm:$0xff]
  %v639 = vld [vmem:[%s6 + $0x48] sm:$0xff]
  %v640 = vld [vmem:[%s6 + $0x50] sm:$0xff]
  %v641 = vld [vmem:[%s6 + $0x58] sm:$0xff]
  %v642 = vld [vmem:[%s6 + $0x60] sm:$0xff]
  %v643 = vld [vmem:[%s6 + $0x68] sm:$0xff]
  %v644 = vld [vmem:[%s6 + $0x70] sm:$0xff]
  %v645 = vld [vmem:[%s6 + $0x78] sm:$0xff]
  %v646 = vld [vmem:[%s6 + $0x80] sm:$0xff]
  %v647 = vld [vmem:[%s6 + $0x88] sm:$0xff]
  %v648 = vld [vmem:[%s6 + $0x90] sm:$0xff]
  %v649 = vld [vmem:[%s6 + $0x98] sm:$0xff]
  %v650 = vld [vmem:[%s6 + $0xa0] sm:$0xff]
  %v651 = vld [vmem:[%s6 + $0xa8] sm:$0xff]
  %v652 = vld [vmem:[%s6 + $0xb0] sm:$0xff]
  %v653 = vld [vmem:[%s6 + $0xb8] sm:$0xff]
  %v654 = vld [vmem:[%s6 + $0xc0] sm:$0xff]
  %v655 = vld [vmem:[%s6 + $0xc8] sm:$0xff]
  %v656 = vld [vmem:[%s6 + $0xd0] sm:$0xff]
  %v657 = vld [vmem:[%s6 + $0xd8] sm:$0xff]
  %v658 = vld [vmem:[%s6 + $0xe0] sm:$0xff]
  %v659 = vld [vmem:[%s6 + $0xe8] sm:$0xff]
  %v660 = vld [vmem:[%s6 + $0xf0] sm:$0xff]
  %v661 = vld [vmem:[%s6 + $0xf8] sm:$0xff]
  %v662 = vadd.f32 %v598, %v630
  %v663 = vadd.f32 %v599, %v631
  %v664 = vadd.f32 %v600, %v632
  %v665 = vadd.f32 %v601, %v633
  %v666 = vadd.f32 %v602, %v634
  %v667 = vadd.f32 %v603, %v635
  %v668 = vadd.f32 %v604, %v636
  %v669 = vadd.f32 %v605, %v637
  %v670 = vadd.f32 %v606, %v638
  %v671 = vadd.f32 %v607, %v639
  %v672 = vadd.f32 %v608, %v640
  %v673 = vadd.f32 %v609, %v641
  %v674 = vadd.f32 %v610, %v642
  %v675 = vadd.f32 %v611, %v643
  %v676 = vadd.f32 %v612, %v644
  %v677 = vadd.f32 %v613, %v645
  %v678 = vadd.f32 %v614, %v646
  %v679 = vadd.f32 %v615, %v647
  %v680 = vadd.f32 %v616, %v648
  %v681 = vadd.f32 %v617, %v649
  %v682 = vadd.f32 %v618, %v650
  %v683 = vadd.f32 %v619, %v651
  %v684 = vadd.f32 %v620, %v652
  %v685 = vadd.f32 %v621, %v653
  %v686 = vadd.f32 %v622, %v654
  %v687 = vadd.f32 %v623, %v655
  %v688 = vadd.f32 %v624, %v656
  %v689 = vadd.f32 %v625, %v657
  %v690 = vadd.f32 %v626, %v658
  %v691 = vadd.f32 %v627, %v659
  %v692 = vadd.f32 %v628, %v660
  %v693 = vadd.f32 %v629, %v661
  %vm694 = vcmask 523264
  %v695 = vsel %vm694, %v662, -inf
  %696 = vmax.xlane.f32.xlu0 %v695
  %v697 = vpop.xlane.xlu0 %696
  %v698 = vsel %vm694, %v663, -inf
  %699 = vmax.xlane.f32.xlu0 %v698
  %v700 = vpop.xlane.xlu0 %699
  %v701 = vsel %vm694, %v664, -inf
  %702 = vmax.xlane.f32.xlu0 %v701
  %v703 = vpop.xlane.xlu0 %702
  %v704 = vsel %vm694, %v665, -inf
  %705 = vmax.xlane.f32.xlu0 %v704
  %v706 = vpop.xlane.xlu0 %705
  %v707 = vsel %vm694, %v666, -inf
  %708 = vmax.xlane.f32.xlu0 %v707
  %v709 = vpop.xlane.xlu0 %708
  %v710 = vsel %vm694, %v667, -inf
  %711 = vmax.xlane.f32.xlu0 %v710
  %v712 = vpop.xlane.xlu0 %711
  %v713 = vsel %vm694, %v668, -inf
  %714 = vmax.xlane.f32.xlu0 %v713
  %v715 = vpop.xlane.xlu0 %714
  %v716 = vsel %vm694, %v669, -inf
  %717 = vmax.xlane.f32.xlu0 %v716
  %v718 = vpop.xlane.xlu0 %717
  %v719 = vsel %vm694, %v670, -inf
  %720 = vmax.xlane.f32.xlu0 %v719
  %v721 = vpop.xlane.xlu0 %720
  %v722 = vsel %vm694, %v671, -inf
  %723 = vmax.xlane.f32.xlu0 %v722
  %v724 = vpop.xlane.xlu0 %723
  %v725 = vsel %vm694, %v672, -inf
  %726 = vmax.xlane.f32.xlu0 %v725
  %v727 = vpop.xlane.xlu0 %726
  %v728 = vsel %vm694, %v673, -inf
  %729 = vmax.xlane.f32.xlu0 %v728
  %v730 = vpop.xlane.xlu0 %729
  %v731 = vsel %vm694, %v674, -inf
  %732 = vmax.xlane.f32.xlu0 %v731
  %v733 = vpop.xlane.xlu0 %732
  %v734 = vsel %vm694, %v675, -inf
  %735 = vmax.xlane.f32.xlu0 %v734
  %v736 = vpop.xlane.xlu0 %735
  %v737 = vsel %vm694, %v676, -inf
  %738 = vmax.xlane.f32.xlu0 %v737
  %v739 = vpop.xlane.xlu0 %738
  %v740 = vsel %vm694, %v677, -inf
  %741 = vmax.xlane.f32.xlu0 %v740
  %v742 = vpop.xlane.xlu0 %741
  %v743 = vsel %vm694, %v678, -inf
  %744 = vmax.xlane.f32.xlu0 %v743
  %v745 = vpop.xlane.xlu0 %744
  %v746 = vsel %vm694, %v679, -inf
  %747 = vmax.xlane.f32.xlu0 %v746
  %v748 = vpop.xlane.xlu0 %747
  %v749 = vsel %vm694, %v680, -inf
  %750 = vmax.xlane.f32.xlu0 %v749
  %v751 = vpop.xlane.xlu0 %750
  %v752 = vsel %vm694, %v681, -inf
  %753 = vmax.xlane.f32.xlu0 %v752
  %v754 = vpop.xlane.xlu0 %753
  %v755 = vsel %vm694, %v682, -inf
  %756 = vmax.xlane.f32.xlu0 %v755
  %v757 = vpop.xlane.xlu0 %756
  %v758 = vsel %vm694, %v683, -inf
  %759 = vmax.xlane.f32.xlu0 %v758
  %v760 = vpop.xlane.xlu0 %759
  %v761 = vsel %vm694, %v684, -inf
  %762 = vmax.xlane.f32.xlu0 %v761
  %v763 = vpop.xlane.xlu0 %762
  %v764 = vsel %vm694, %v685, -inf
  %765 = vmax.xlane.f32.xlu0 %v764
  %v766 = vpop.xlane.xlu0 %765
  %v767 = vsel %vm694, %v686, -inf
  %768 = vmax.xlane.f32.xlu0 %v767
  %v769 = vpop.xlane.xlu0 %768
  %v770 = vsel %vm694, %v687, -inf
  %771 = vmax.xlane.f32.xlu0 %v770
  %v772 = vpop.xlane.xlu0 %771
  %v773 = vsel %vm694, %v688, -inf
  %774 = vmax.xlane.f32.xlu0 %v773
  %v775 = vpop.xlane.xlu0 %774
  %v776 = vsel %vm694, %v689, -inf
  %777 = vmax.xlane.f32.xlu0 %v776
  %v778 = vpop.xlane.xlu0 %777
  %v779 = vsel %vm694, %v690, -inf
  %780 = vmax.xlane.f32.xlu0 %v779
  %v781 = vpop.xlane.xlu0 %780
  %v782 = vsel %vm694, %v691, -inf
  %783 = vmax.xlane.f32.xlu0 %v782
  %v784 = vpop.xlane.xlu0 %783
  %v785 = vsel %vm694, %v692, -inf
  %786 = vmax.xlane.f32.xlu0 %v785
  %v787 = vpop.xlane.xlu0 %786
  %v788 = vsel %vm694, %v693, -inf
  %789 = vmax.xlane.f32.xlu0 %v788
  %v790 = vpop.xlane.xlu0 %789
  %v791 = vsub.f32 %v662, %v697
  %v792 = vsub.f32 %v663, %v700
  %v793 = vsub.f32 %v664, %v703
  %v794 = vsub.f32 %v665, %v706
  %v795 = vsub.f32 %v666, %v709
  %v796 = vsub.f32 %v667, %v712
  %v797 = vsub.f32 %v668, %v715
  %v798 = vsub.f32 %v669, %v718
  %v799 = vsub.f32 %v670, %v721
  %v800 = vsub.f32 %v671, %v724
  %v801 = vsub.f32 %v672, %v727
  %v802 = vsub.f32 %v673, %v730
  %v803 = vsub.f32 %v674, %v733
  %v804 = vsub.f32 %v675, %v736
  %v805 = vsub.f32 %v676, %v739
  %v806 = vsub.f32 %v677, %v742
  %v807 = vsub.f32 %v678, %v745
  %v808 = vsub.f32 %v679, %v748
  %v809 = vsub.f32 %v680, %v751
  %v810 = vsub.f32 %v681, %v754
  %v811 = vsub.f32 %v682, %v757
  %v812 = vsub.f32 %v683, %v760
  %v813 = vsub.f32 %v684, %v763
  %v814 = vsub.f32 %v685, %v766
  %v815 = vsub.f32 %v686, %v769
  %v816 = vsub.f32 %v687, %v772
  %v817 = vsub.f32 %v688, %v775
  %v818 = vsub.f32 %v689, %v778
  %v819 = vsub.f32 %v690, %v781
  %v820 = vsub.f32 %v691, %v784
  %v821 = vsub.f32 %v692, %v787
  %v822 = vsub.f32 %v693, %v790
  %v823 = vmul.f32 %v791, 1.442695
  %v824 = vpow.pop %v823
  %v825 = vmul.f32 %v792, 1.442695
  %v826 = vpow.pop %v825
  %v827 = vmul.f32 %v793, 1.442695
  %v828 = vpow.pop %v827
  %v829 = vmul.f32 %v794, 1.442695
  %v830 = vpow.pop %v829
  %v831 = vmul.f32 %v795, 1.442695
  %v832 = vpow.pop %v831
  %v833 = vmul.f32 %v796, 1.442695
  %v834 = vpow.pop %v833
  %v835 = vmul.f32 %v797, 1.442695
  %v836 = vpow.pop %v835
  %v837 = vmul.f32 %v798, 1.442695
  %v838 = vpow.pop %v837
  %v839 = vmul.f32 %v799, 1.442695
  %v840 = vpow.pop %v839
  %v841 = vmul.f32 %v800, 1.442695
  %v842 = vpow.pop %v841
  %v843 = vmul.f32 %v801, 1.442695
  %v844 = vpow.pop %v843
  %v845 = vmul.f32 %v802, 1.442695
  %v846 = vpow.pop %v845
  %v847 = vmul.f32 %v803, 1.442695
  %v848 = vpow.pop %v847
  %v849 = vmul.f32 %v804, 1.442695
  %v850 = vpow.pop %v849
  %v851 = vmul.f32 %v805, 1.442695
  %v852 = vpow.pop %v851
  %v853 = vmul.f32 %v806, 1.442695
  %v854 = vpow.pop %v853
  %v855 = vmul.f32 %v807, 1.442695
  %v856 = vpow.pop %v855
  %v857 = vmul.f32 %v808, 1.442695
  %v858 = vpow.pop %v857
  %v859 = vmul.f32 %v809, 1.442695
  %v860 = vpow.pop %v859
  %v861 = vmul.f32 %v810, 1.442695
  %v862 = vpow.pop %v861
  %v863 = vmul.f32 %v811, 1.442695
  %v864 = vpow.pop %v863
  %v865 = vmul.f32 %v812, 1.442695
  %v866 = vpow.pop %v865
  %v867 = vmul.f32 %v813, 1.442695
  %v868 = vpow.pop %v867
  %v869 = vmul.f32 %v814, 1.442695
  %v870 = vpow.pop %v869
  %v871 = vmul.f32 %v815, 1.442695
  %v872 = vpow.pop %v871
  %v873 = vmul.f32 %v816, 1.442695
  %v874 = vpow.pop %v873
  %v875 = vmul.f32 %v817, 1.442695
  %v876 = vpow.pop %v875
  %v877 = vmul.f32 %v818, 1.442695
  %v878 = vpow.pop %v877
  %v879 = vmul.f32 %v819, 1.442695
  %v880 = vpow.pop %v879
  %v881 = vmul.f32 %v820, 1.442695
  %v882 = vpow.pop %v881
  %v883 = vmul.f32 %v821, 1.442695
  %v884 = vpow.pop %v883
  %v885 = vmul.f32 %v822, 1.442695
  %v886 = vpow.pop %v885
  %v887 = vsel %vm694, %v824, 0.0
  %888 = vadd.xlane.f32.xlu0 %v887
  %v889 = vpop.xlane.xlu0 %888
  %v890 = vsel %vm694, %v826, 0.0
  %891 = vadd.xlane.f32.xlu0 %v890
  %v892 = vpop.xlane.xlu0 %891
  %v893 = vsel %vm694, %v828, 0.0
  %894 = vadd.xlane.f32.xlu0 %v893
  %v895 = vpop.xlane.xlu0 %894
  %v896 = vsel %vm694, %v830, 0.0
  %897 = vadd.xlane.f32.xlu0 %v896
  %v898 = vpop.xlane.xlu0 %897
  %v899 = vsel %vm694, %v832, 0.0
  %900 = vadd.xlane.f32.xlu0 %v899
  %v901 = vpop.xlane.xlu0 %900
  %v902 = vsel %vm694, %v834, 0.0
  %903 = vadd.xlane.f32.xlu0 %v902
  %v904 = vpop.xlane.xlu0 %903
  %v905 = vsel %vm694, %v836, 0.0
  %906 = vadd.xlane.f32.xlu0 %v905
  %v907 = vpop.xlane.xlu0 %906
  %v908 = vsel %vm694, %v838, 0.0
  %909 = vadd.xlane.f32.xlu0 %v908
  %v910 = vpop.xlane.xlu0 %909
  %v911 = vsel %vm694, %v840, 0.0
  %912 = vadd.xlane.f32.xlu0 %v911
  %v913 = vpop.xlane.xlu0 %912
  %v914 = vsel %vm694, %v842, 0.0
  %915 = vadd.xlane.f32.xlu0 %v914
  %v916 = vpop.xlane.xlu0 %915
  %v917 = vsel %vm694, %v844, 0.0
  %918 = vadd.xlane.f32.xlu0 %v917
  %v919 = vpop.xlane.xlu0 %918
  %v920 = vsel %vm694, %v846, 0.0
  %921 = vadd.xlane.f32.xlu0 %v920
  %v922 = vpop.xlane.xlu0 %921
  %v923 = vsel %vm694, %v848, 0.0
  %924 = vadd.xlane.f32.xlu0 %v923
  %v925 = vpop.xlane.xlu0 %924
  %v926 = vsel %vm694, %v850, 0.0
  %927 = vadd.xlane.f32.xlu0 %v926
  %v928 = vpop.xlane.xlu0 %927
  %v929 = vsel %vm694, %v852, 0.0
  %930 = vadd.xlane.f32.xlu0 %v929
  %v931 = vpop.xlane.xlu0 %930
  %v932 = vsel %vm694, %v854, 0.0
  %933 = vadd.xlane.f32.xlu0 %v932
  %v934 = vpop.xlane.xlu0 %933
  %v935 = vsel %vm694, %v856, 0.0
  %936 = vadd.xlane.f32.xlu0 %v935
  %v937 = vpop.xlane.xlu0 %936
  %v938 = vsel %vm694, %v858, 0.0
  %939 = vadd.xlane.f32.xlu0 %v938
  %v940 = vpop.xlane.xlu0 %939
  %v941 = vsel %vm694, %v860, 0.0
  %942 = vadd.xlane.f32.xlu0 %v941
  %v943 = vpop.xlane.xlu0 %942
  %v944 = vsel %vm694, %v862, 0.0
  %945 = vadd.xlane.f32.xlu0 %v944
  %v946 = vpop.xlane.xlu0 %945
  %v947 = vsel %vm694, %v864, 0.0
  %948 = vadd.xlane.f32.xlu0 %v947
  %v949 = vpop.xlane.xlu0 %948
  %v950 = vsel %vm694, %v866, 0.0
  %951 = vadd.xlane.f32.xlu0 %v950
  %v952 = vpop.xlane.xlu0 %951
  %v953 = vsel %vm694, %v868, 0.0
  %954 = vadd.xlane.f32.xlu0 %v953
  %v955 = vpop.xlane.xlu0 %954
  %v956 = vsel %vm694, %v870, 0.0
  %957 = vadd.xlane.f32.xlu0 %v956
  %v958 = vpop.xlane.xlu0 %957
  %v959 = vsel %vm694, %v872, 0.0
  %960 = vadd.xlane.f32.xlu0 %v959
  %v961 = vpop.xlane.xlu0 %960
  %v962 = vsel %vm694, %v874, 0.0
  %963 = vadd.xlane.f32.xlu0 %v962
  %v964 = vpop.xlane.xlu0 %963
  %v965 = vsel %vm694, %v876, 0.0
  %966 = vadd.xlane.f32.xlu0 %v965
  %v967 = vpop.xlane.xlu0 %966
  %v968 = vsel %vm694, %v878, 0.0
  %969 = vadd.xlane.f32.xlu0 %v968
  %v970 = vpop.xlane.xlu0 %969
  %v971 = vsel %vm694, %v880, 0.0
  %972 = vadd.xlane.f32.xlu0 %v971
  %v973 = vpop.xlane.xlu0 %972
  %v974 = vsel %vm694, %v882, 0.0
  %975 = vadd.xlane.f32.xlu0 %v974
  %v976 = vpop.xlane.xlu0 %975
  %v977 = vsel %vm694, %v884, 0.0
  %978 = vadd.xlane.f32.xlu0 %v977
  %v979 = vpop.xlane.xlu0 %978
  %v980 = vsel %vm694, %v886, 0.0
  %981 = vadd.xlane.f32.xlu0 %v980
  %v982 = vpop.xlane.xlu0 %981
  %v983 = vrcp.pop %v889
  %v984 = vmul.f32 %v824, %v983
  %v985 = vrcp.pop %v892
  %v986 = vmul.f32 %v826, %v985
  %v987 = vrcp.pop %v895
  %v988 = vmul.f32 %v828, %v987
  %v989 = vrcp.pop %v898
  %v990 = vmul.f32 %v830, %v989
  %v991 = vrcp.pop %v901
  %v992 = vmul.f32 %v832, %v991
  %v993 = vrcp.pop %v904
  %v994 = vmul.f32 %v834, %v993
  %v995 = vrcp.pop %v907
  %v996 = vmul.f32 %v836, %v995
  %v997 = vrcp.pop %v910
  %v998 = vmul.f32 %v838, %v997
  %v999 = vrcp.pop %v913
  %v1000 = vmul.f32 %v840, %v999
  %v1001 = vrcp.pop %v916
  %v1002 = vmul.f32 %v842, %v1001
  %v1003 = vrcp.pop %v919
  %v1004 = vmul.f32 %v844, %v1003
  %v1005 = vrcp.pop %v922
  %v1006 = vmul.f32 %v846, %v1005
  %v1007 = vrcp.pop %v925
  %v1008 = vmul.f32 %v848, %v1007
  %v1009 = vrcp.pop %v928
  %v1010 = vmul.f32 %v850, %v1009
  %v1011 = vrcp.pop %v931
  %v1012 = vmul.f32 %v852, %v1011
  %v1013 = vrcp.pop %v934
  %v1014 = vmul.f32 %v854, %v1013
  %v1015 = vrcp.pop %v937
  %v1016 = vmul.f32 %v856, %v1015
  %v1017 = vrcp.pop %v940
  %v1018 = vmul.f32 %v858, %v1017
  %v1019 = vrcp.pop %v943
  %v1020 = vmul.f32 %v860, %v1019
  %v1021 = vrcp.pop %v946
  %v1022 = vmul.f32 %v862, %v1021
  %v1023 = vrcp.pop %v949
  %v1024 = vmul.f32 %v864, %v1023
  %v1025 = vrcp.pop %v952
  %v1026 = vmul.f32 %v866, %v1025
  %v1027 = vrcp.pop %v955
  %v1028 = vmul.f32 %v868, %v1027
  %v1029 = vrcp.pop %v958
  %v1030 = vmul.f32 %v870, %v1029
  %v1031 = vrcp.pop %v961
  %v1032 = vmul.f32 %v872, %v1031
  %v1033 = vrcp.pop %v964
  %v1034 = vmul.f32 %v874, %v1033
  %v1035 = vrcp.pop %v967
  %v1036 = vmul.f32 %v876, %v1035
  %v1037 = vrcp.pop %v970
  %v1038 = vmul.f32 %v878, %v1037
  %v1039 = vrcp.pop %v973
  %v1040 = vmul.f32 %v880, %v1039
  %v1041 = vrcp.pop %v976
  %v1042 = vmul.f32 %v882, %v1041
  %v1043 = vrcp.pop %v979
  %v1044 = vmul.f32 %v884, %v1043
  %v1045 = vrcp.pop %v982
  %v1046 = vmul.f32 %v886, %v1045
  %1047 = vrot.lane.b32.xlu0 %v135, 96
  %v1048 = vpop.permute.xlu0 %1047
  %1049 = vrot.lane.b32.xlu0 %v140, 96
  %v1050 = vpop.permute.xlu0 %1049
  %1051 = vrot.lane.b32.xlu0 %v145, 96
  %v1052 = vpop.permute.xlu0 %1051
  %1053 = vrot.lane.b32.xlu0 %v150, 96
  %v1054 = vpop.permute.xlu0 %1053
  %1055 = vrot.lane.b32.xlu0 %v155, 96
  %v1056 = vpop.permute.xlu0 %1055
  %1057 = vrot.lane.b32.xlu0 %v160, 96
  %v1058 = vpop.permute.xlu0 %1057
  %1059 = vrot.lane.b32.xlu0 %v165, 96
  %v1060 = vpop.permute.xlu0 %1059
  %1061 = vrot.lane.b32.xlu0 %v170, 96
  %v1062 = vpop.permute.xlu0 %1061
  %v1072 = vsel %vm694, %v984, 0
  %v1075 = vsel %vm694, %v986, 0
  %v1078 = vsel %vm694, %v988, 0
  %v1081 = vsel %vm694, %v990, 0
  %v1084 = vsel %vm694, %v992, 0
  %v1087 = vsel %vm694, %v994, 0
  %v1090 = vsel %vm694, %v996, 0
  %v1093 = vsel %vm694, %v998, 0
  %v1096 = vsel %vm694, %v1000, 0
  %v1099 = vsel %vm694, %v1002, 0
  %v1102 = vsel %vm694, %v1004, 0
  %v1105 = vsel %vm694, %v1006, 0
  %v1108 = vsel %vm694, %v1008, 0
  %v1111 = vsel %vm694, %v1010, 0
  %v1114 = vsel %vm694, %v1012, 0
  %v1117 = vsel %vm694, %v1014, 0
  %v1120 = vsel %vm694, %v1016, 0
  %v1123 = vsel %vm694, %v1018, 0
  %v1126 = vsel %vm694, %v1020, 0
  %v1129 = vsel %vm694, %v1022, 0
  %v1132 = vsel %vm694, %v1024, 0
  %v1135 = vsel %vm694, %v1026, 0
  %v1138 = vsel %vm694, %v1028, 0
  %v1141 = vsel %vm694, %v1030, 0
  %v1144 = vsel %vm694, %v1032, 0
  %v1147 = vsel %vm694, %v1034, 0
  %v1150 = vsel %vm694, %v1036, 0
  %v1153 = vsel %vm694, %v1038, 0
  %v1156 = vsel %vm694, %v1040, 0
  %v1159 = vsel %vm694, %v1042, 0
  %v1162 = vsel %vm694, %v1044, 0
  %v1165 = vsel %vm694, %v1046, 0
  %1167 = vmatprep.subr.mxu0 0.0
  %1168 = vmatpush1.msra.mxu0 %v1048
  %1169 = vmatprep.subr.mxu0 0.0
  %1170 = vmatpush1.msra.mxu0 %v1050
  %1171 = vmatprep.subr.mxu0 0.0
  %1172 = vmatpush1.msra.mxu0 %v1052
  %1173 = vmatprep.subr.mxu0 0.0
  %1174 = vmatpush1.msra.mxu0 %v1054
  %1175 = vmatprep.subr.mxu0 0.0
  %1176 = vmatpush1.msra.mxu0 %v1056
  %1177 = vmatprep.subr.mxu0 0.0
  %1178 = vmatpush1.msra.mxu0 %v1058
  %1179 = vmatprep.subr.mxu0 0.0
  %1180 = vmatpush1.msra.mxu0 %v1060
  %1181 = vmatprep.subr.mxu0 0.0
  %1182 = vmatpush1.msra.mxu0 %v1062
  %1183 = vmatprep.subr.mxu0 0.0
  %1184 = vmatpush1.msra.mxu0 0.0
  %1185 = vmatprep.subr.mxu0 0.0
  %1186 = vmatpush1.msra.mxu0 0.0
  %1187 = vmatprep.subr.mxu0 0.0
  %1188 = vmatpush1.msra.mxu0 0.0
  %1189 = vmatprep.subr.mxu0 0.0
  %1190 = vmatpush1.msra.mxu0 0.0
  %1191 = vmatprep.subr.mxu0 0.0
  %1192 = vmatpush1.msra.mxu0 0.0
  %1193 = vmatprep.subr.mxu0 0.0
  %1194 = vmatpush1.msra.mxu0 0.0
  %1195 = vmatprep.subr.mxu0 0.0
  %1196 = vmatpush1.msra.mxu0 0.0
  %1197 = vmatprep.subr.mxu0 0.0
  %1198 = vmatpush1.msra.mxu0 0.0
  %1199 = vmatprep.subr.mxu0 0.0
  %1200 = vmatpush1.msra.mxu0 0.0
  %1201 = vmatprep.subr.mxu0 0.0
  %1202 = vmatpush1.msra.mxu0 0.0
  %1203 = vmatprep.subr.mxu0 0.0
  %1204 = vmatpush1.msra.mxu0 0.0
  %1205 = vmatprep.subr.mxu0 0.0
  %1206 = vmatpush1.msra.mxu0 0.0
  %1207 = vmatprep.subr.mxu0 0.0
  %1208 = vmatpush1.msra.mxu0 0.0
  %1209 = vmatprep.subr.mxu0 0.0
  %1210 = vmatpush1.msra.mxu0 0.0
  %1211 = vmatprep.subr.mxu0 0.0
  %1212 = vmatpush1.msra.mxu0 0.0
  %1213 = vmatprep.subr.mxu0 0.0
  %1214 = vmatpush1.msra.mxu0 0.0
  %1215 = vmatprep.subr.mxu0 0.0
  %1216 = vmatpush1.msra.mxu0 0.0
  %1217 = vmatprep.subr.mxu0 0.0
  %1218 = vmatpush1.msra.mxu0 0.0
  %1219 = vmatprep.subr.mxu0 0.0
  %1220 = vmatpush1.msra.mxu0 0.0
  %1221 = vmatprep.subr.mxu0 0.0
  %1222 = vmatpush1.msra.mxu0 0.0
  %1223 = vmatprep.subr.mxu0 0.0
  %1224 = vmatpush1.msra.mxu0 0.0
  %1225 = vmatprep.subr.mxu0 0.0
  %1226 = vmatpush1.msra.mxu0 0.0
  %1227 = vmatprep.subr.mxu0 0.0
  %1228 = vmatpush1.msra.mxu0 0.0
  %1229 = vmatprep.subr.mxu0 0.0
  %1230 = vmatpush1.msra.mxu0 0.0
  %1231 = vmatprep.mubr.f32.mxu0 0.0
  %1232 = vmatmul.mubr.f32.gmra.mrb[0].mxu0 %v1072
  %v1233 = vpop.f32.mrb[0].mxu0
  %v1234 = vadd.f32 0.0, %v1233
  %v1235 = vpop.f32.mrb[0].mxu0
  %1236 = vmatprep.mubr.f32.mxu0 0.0
  %1237 = vmatmul.mubr.f32.gmra.mrb[0].mxu0 %v1075
  %v1238 = vpop.f32.mrb[0].mxu0
  %v1239 = vadd.f32 0.0, %v1238
  %v1240 = vpop.f32.mrb[0].mxu0
  %1241 = vmatprep.mubr.f32.mxu0 0.0
  %1242 = vmatmul.mubr.f32.gmra.mrb[0].mxu0 %v1078
  %v1243 = vpop.f32.mrb[0].mxu0
  %v1244 = vadd.f32 0.0, %v1243
  %v1245 = vpop.f32.mrb[0].mxu0
  %1246 = vmatprep.mubr.f32.mxu0 0.0
  %1247 = vmatmul.mubr.f32.gmra.mrb[0].mxu0 %v1081
  %v1248 = vpop.f32.mrb[0].mxu0
  %v1249 = vadd.f32 0.0, %v1248
  %v1250 = vpop.f32.mrb[0].mxu0
  %1251 = vmatprep.mubr.f32.mxu0 0.0
  %1252 = vmatmul.mubr.f32.gmra.mrb[0].mxu0 %v1084
  %v1253 = vpop.f32.mrb[0].mxu0
  %v1254 = vadd.f32 0.0, %v1253
  %v1255 = vpop.f32.mrb[0].mxu0
  %1256 = vmatprep.mubr.f32.mxu0 0.0
  %1257 = vmatmul.mubr.f32.gmra.mrb[0].mxu0 %v1087
  %v1258 = vpop.f32.mrb[0].mxu0
  %v1259 = vadd.f32 0.0, %v1258
  %v1260 = vpop.f32.mrb[0].mxu0
  %1261 = vmatprep.mubr.f32.mxu0 0.0
  %1262 = vmatmul.mubr.f32.gmra.mrb[0].mxu0 %v1090
  %v1263 = vpop.f32.mrb[0].mxu0
  %v1264 = vadd.f32 0.0, %v1263
  %v1265 = vpop.f32.mrb[0].mxu0
  %1266 = vmatprep.mubr.f32.mxu0 0.0
  %1267 = vmatmul.mubr.f32.gmra.mrb[0].mxu0 %v1093
  %v1268 = vpop.f32.mrb[0].mxu0
  %v1269 = vadd.f32 0.0, %v1268
  %v1270 = vpop.f32.mrb[0].mxu0
  %1271 = vmatprep.mubr.f32.mxu0 0.0
  %1272 = vmatmul.mubr.f32.gmra.mrb[0].mxu0 %v1096
  %v1273 = vpop.f32.mrb[0].mxu0
  %v1274 = vadd.f32 0.0, %v1273
  %v1275 = vpop.f32.mrb[0].mxu0
  %1276 = vmatprep.mubr.f32.mxu0 0.0
  %1277 = vmatmul.mubr.f32.gmra.mrb[0].mxu0 %v1099
  %v1278 = vpop.f32.mrb[0].mxu0
  %v1279 = vadd.f32 0.0, %v1278
  %v1280 = vpop.f32.mrb[0].mxu0
  %1281 = vmatprep.mubr.f32.mxu0 0.0
  %1282 = vmatmul.mubr.f32.gmra.mrb[0].mxu0 %v1102
  %v1283 = vpop.f32.mrb[0].mxu0
  %v1284 = vadd.f32 0.0, %v1283
  %v1285 = vpop.f32.mrb[0].mxu0
  %1286 = vmatprep.mubr.f32.mxu0 0.0
  %1287 = vmatmul.mubr.f32.gmra.mrb[0].mxu0 %v1105
  %v1288 = vpop.f32.mrb[0].mxu0
  %v1289 = vadd.f32 0.0, %v1288
  %v1290 = vpop.f32.mrb[0].mxu0
  %1291 = vmatprep.mubr.f32.mxu0 0.0
  %1292 = vmatmul.mubr.f32.gmra.mrb[0].mxu0 %v1108
  %v1293 = vpop.f32.mrb[0].mxu0
  %v1294 = vadd.f32 0.0, %v1293
  %v1295 = vpop.f32.mrb[0].mxu0
  %1296 = vmatprep.mubr.f32.mxu0 0.0
  %1297 = vmatmul.mubr.f32.gmra.mrb[0].mxu0 %v1111
  %v1298 = vpop.f32.mrb[0].mxu0
  %v1299 = vadd.f32 0.0, %v1298
  %v1300 = vpop.f32.mrb[0].mxu0
  %1301 = vmatprep.mubr.f32.mxu0 0.0
  %1302 = vmatmul.mubr.f32.gmra.mrb[0].mxu0 %v1114
  %v1303 = vpop.f32.mrb[0].mxu0
  %v1304 = vadd.f32 0.0, %v1303
  %v1305 = vpop.f32.mrb[0].mxu0
  %1306 = vmatprep.mubr.f32.mxu0 0.0
  %1307 = vmatmul.mubr.f32.gmra.mrb[0].mxu0 %v1117
  %v1308 = vpop.f32.mrb[0].mxu0
  %v1309 = vadd.f32 0.0, %v1308
  %v1310 = vpop.f32.mrb[0].mxu0
  %1311 = vmatprep.mubr.f32.mxu0 0.0
  %1312 = vmatmul.mubr.f32.gmra.mrb[0].mxu0 %v1120
  %v1313 = vpop.f32.mrb[0].mxu0
  %v1314 = vadd.f32 0.0, %v1313
  %v1315 = vpop.f32.mrb[0].mxu0
  %1316 = vmatprep.mubr.f32.mxu0 0.0
  %1317 = vmatmul.mubr.f32.gmra.mrb[0].mxu0 %v1123
  %v1318 = vpop.f32.mrb[0].mxu0
  %v1319 = vadd.f32 0.0, %v1318
  %v1320 = vpop.f32.mrb[0].mxu0
  %1321 = vmatprep.mubr.f32.mxu0 0.0
  %1322 = vmatmul.mubr.f32.gmra.mrb[0].mxu0 %v1126
  %v1323 = vpop.f32.mrb[0].mxu0
  %v1324 = vadd.f32 0.0, %v1323
  %v1325 = vpop.f32.mrb[0].mxu0
  %1326 = vmatprep.mubr.f32.mxu0 0.0
  %1327 = vmatmul.mubr.f32.gmra.mrb[0].mxu0 %v1129
  %v1328 = vpop.f32.mrb[0].mxu0
  %v1329 = vadd.f32 0.0, %v1328
  %v1330 = vpop.f32.mrb[0].mxu0
  %1331 = vmatprep.mubr.f32.mxu0 0.0
  %1332 = vmatmul.mubr.f32.gmra.mrb[0].mxu0 %v1132
  %v1333 = vpop.f32.mrb[0].mxu0
  %v1334 = vadd.f32 0.0, %v1333
  %v1335 = vpop.f32.mrb[0].mxu0
  %1336 = vmatprep.mubr.f32.mxu0 0.0
  %1337 = vmatmul.mubr.f32.gmra.mrb[0].mxu0 %v1135
  %v1338 = vpop.f32.mrb[0].mxu0
  %v1339 = vadd.f32 0.0, %v1338
  %v1340 = vpop.f32.mrb[0].mxu0
  %1341 = vmatprep.mubr.f32.mxu0 0.0
  %1342 = vmatmul.mubr.f32.gmra.mrb[0].mxu0 %v1138
  %v1343 = vpop.f32.mrb[0].mxu0
  %v1344 = vadd.f32 0.0, %v1343
  %v1345 = vpop.f32.mrb[0].mxu0
  %1346 = vmatprep.mubr.f32.mxu0 0.0
  %1347 = vmatmul.mubr.f32.gmra.mrb[0].mxu0 %v1141
  %v1348 = vpop.f32.mrb[0].mxu0
  %v1349 = vadd.f32 0.0, %v1348
  %v1350 = vpop.f32.mrb[0].mxu0
  %1351 = vmatprep.mubr.f32.mxu0 0.0
  %1352 = vmatmul.mubr.f32.gmra.mrb[0].mxu0 %v1144
  %v1353 = vpop.f32.mrb[0].mxu0
  %v1354 = vadd.f32 0.0, %v1353
  %v1355 = vpop.f32.mrb[0].mxu0
  %1356 = vmatprep.mubr.f32.mxu0 0.0
  %1357 = vmatmul.mubr.f32.gmra.mrb[0].mxu0 %v1147
  %v1358 = vpop.f32.mrb[0].mxu0
  %v1359 = vadd.f32 0.0, %v1358
  %v1360 = vpop.f32.mrb[0].mxu0
  %1361 = vmatprep.mubr.f32.mxu0 0.0
  %1362 = vmatmul.mubr.f32.gmra.mrb[0].mxu0 %v1150
  %v1363 = vpop.f32.mrb[0].mxu0
  %v1364 = vadd.f32 0.0, %v1363
  %v1365 = vpop.f32.mrb[0].mxu0
  %1366 = vmatprep.mubr.f32.mxu0 0.0
  %1367 = vmatmul.mubr.f32.gmra.mrb[0].mxu0 %v1153
  %v1368 = vpop.f32.mrb[0].mxu0
  %v1369 = vadd.f32 0.0, %v1368
  %v1370 = vpop.f32.mrb[0].mxu0
  %1371 = vmatprep.mubr.f32.mxu0 0.0
  %1372 = vmatmul.mubr.f32.gmra.mrb[0].mxu0 %v1156
  %v1373 = vpop.f32.mrb[0].mxu0
  %v1374 = vadd.f32 0.0, %v1373
  %v1375 = vpop.f32.mrb[0].mxu0
  %1376 = vmatprep.mubr.f32.mxu0 0.0
  %1377 = vmatmul.mubr.f32.gmra.mrb[0].mxu0 %v1159
  %v1378 = vpop.f32.mrb[0].mxu0
  %v1379 = vadd.f32 0.0, %v1378
  %v1380 = vpop.f32.mrb[0].mxu0
  %1381 = vmatprep.mubr.f32.mxu0 0.0
  %1382 = vmatmul.mubr.f32.gmra.mrb[0].mxu0 %v1162
  %v1383 = vpop.f32.mrb[0].mxu0
  %v1384 = vadd.f32 0.0, %v1383
  %v1385 = vpop.f32.mrb[0].mxu0
  %1386 = vmatprep.mubr.f32.mxu0 0.0
  %1387 = vmatmul.mubr.f32.gmra.mrb[0].mxu0 %v1165
  %v1388 = vpop.f32.mrb[0].mxu0
  %v1389 = vadd.f32 0.0, %v1388
  %v1390 = vpop.f32.mrb[0].mxu0
  %1391 = vdwg.mxu0
  %v1392 = vmul.f32 %v1234, %v173
  %v1393 = vmul.f32 %v1239, %v174
  %v1394 = vmul.f32 %v1244, %v175
  %v1395 = vmul.f32 %v1249, %v176
  %v1396 = vmul.f32 %v1254, %v177
  %v1397 = vmul.f32 %v1259, %v178
  %v1398 = vmul.f32 %v1264, %v179
  %v1399 = vmul.f32 %v1269, %v180
  %v1400 = vmul.f32 %v1274, %v181
  %v1401 = vmul.f32 %v1279, %v182
  %v1402 = vmul.f32 %v1284, %v183
  %v1403 = vmul.f32 %v1289, %v184
  %v1404 = vmul.f32 %v1294, %v185
  %v1405 = vmul.f32 %v1299, %v186
  %v1406 = vmul.f32 %v1304, %v187
  %v1407 = vmul.f32 %v1309, %v188
  %v1408 = vmul.f32 %v1314, %v189
  %v1409 = vmul.f32 %v1319, %v190
  %v1410 = vmul.f32 %v1324, %v191
  %v1411 = vmul.f32 %v1329, %v192
  %v1412 = vmul.f32 %v1334, %v193
  %v1413 = vmul.f32 %v1339, %v194
  %v1414 = vmul.f32 %v1344, %v195
  %v1415 = vmul.f32 %v1349, %v196
  %v1416 = vmul.f32 %v1354, %v197
  %v1417 = vmul.f32 %v1359, %v198
  %v1418 = vmul.f32 %v1364, %v199
  %v1419 = vmul.f32 %v1369, %v200
  %v1420 = vmul.f32 %v1374, %v201
  %v1421 = vmul.f32 %v1379, %v202
  %v1422 = vmul.f32 %v1384, %v203
  %v1423 = vmul.f32 %v1389, %v204
  %v1424 = vadd.f32 %v1392, %v1400
  %v1425 = vadd.f32 %v1393, %v1401
  %v1426 = vadd.f32 %v1394, %v1402
  %v1427 = vadd.f32 %v1395, %v1403
  %v1428 = vadd.f32 %v1396, %v1404
  %v1429 = vadd.f32 %v1397, %v1405
  %v1430 = vadd.f32 %v1398, %v1406
  %v1431 = vadd.f32 %v1399, %v1407
  %v1432 = vadd.f32 %v1424, %v1408
  %v1433 = vadd.f32 %v1425, %v1409
  %v1434 = vadd.f32 %v1426, %v1410
  %v1435 = vadd.f32 %v1427, %v1411
  %v1436 = vadd.f32 %v1428, %v1412
  %v1437 = vadd.f32 %v1429, %v1413
  %v1438 = vadd.f32 %v1430, %v1414
  %v1439 = vadd.f32 %v1431, %v1415
  %v1440 = vadd.f32 %v1432, %v1416
  %v1441 = vadd.f32 %v1433, %v1417
  %v1442 = vadd.f32 %v1434, %v1418
  %v1443 = vadd.f32 %v1435, %v1419
  %v1444 = vadd.f32 %v1436, %v1420
  %v1445 = vadd.f32 %v1437, %v1421
  %v1446 = vadd.f32 %v1438, %v1422
  %v1447 = vadd.f32 %v1439, %v1423
  %v1448 = vld [vmem:[%s4] sm:$0x1]
  %v1449 = vld [vmem:[%s3] sm:$0xff]
  %v1450 = vld [vmem:[%s3 + $0x8] sm:$0xff]
  %v1452 = vsel %vm43, %v1440, 0
  %v1455 = vsel %vm43, %v1441, 0
  %v1458 = vsel %vm43, %v1442, 0
  %v1461 = vsel %vm43, %v1443, 0
  %v1464 = vsel %vm43, %v1444, 0
  %v1467 = vsel %vm43, %v1445, 0
  %v1470 = vsel %vm43, %v1446, 0
  %v1473 = vsel %vm43, %v1447, 0
  %1475 = vmatprep.subr.mxu0 0.0
  %1476 = vmatpush1.msra.mxu0 %v1449
  %1477 = vmatprep.subr.mxu0 0.0
  %1478 = vmatpush1.msra.mxu0 %v1450
  %1479 = vmatprep.subr.mxu0 0.0
  %1480 = vmatpush1.msra.mxu0 0.0
  %1481 = vmatprep.subr.mxu0 0.0
  %1482 = vmatpush1.msra.mxu0 0.0
  %1483 = vmatprep.subr.mxu0 0.0
  %1484 = vmatpush1.msra.mxu0 0.0
  %1485 = vmatprep.subr.mxu0 0.0
  %1486 = vmatpush1.msra.mxu0 0.0
  %1487 = vmatprep.subr.mxu0 0.0
  %1488 = vmatpush1.msra.mxu0 0.0
  %1489 = vmatprep.subr.mxu0 0.0
  %1490 = vmatpush1.msra.mxu0 0.0
  %1491 = vmatprep.subr.mxu0 0.0
  %1492 = vmatpush1.msra.mxu0 0.0
  %1493 = vmatprep.subr.mxu0 0.0
  %1494 = vmatpush1.msra.mxu0 0.0
  %1495 = vmatprep.subr.mxu0 0.0
  %1496 = vmatpush1.msra.mxu0 0.0
  %1497 = vmatprep.subr.mxu0 0.0
  %1498 = vmatpush1.msra.mxu0 0.0
  %1499 = vmatprep.subr.mxu0 0.0
  %1500 = vmatpush1.msra.mxu0 0.0
  %1501 = vmatprep.subr.mxu0 0.0
  %1502 = vmatpush1.msra.mxu0 0.0
  %1503 = vmatprep.subr.mxu0 0.0
  %1504 = vmatpush1.msra.mxu0 0.0
  %1505 = vmatprep.subr.mxu0 0.0
  %1506 = vmatpush1.msra.mxu0 0.0
  %1507 = vmatprep.subr.mxu0 0.0
  %1508 = vmatpush1.msra.mxu0 0.0
  %1509 = vmatprep.subr.mxu0 0.0
  %1510 = vmatpush1.msra.mxu0 0.0
  %1511 = vmatprep.subr.mxu0 0.0
  %1512 = vmatpush1.msra.mxu0 0.0
  %1513 = vmatprep.subr.mxu0 0.0
  %1514 = vmatpush1.msra.mxu0 0.0
  %1515 = vmatprep.subr.mxu0 0.0
  %1516 = vmatpush1.msra.mxu0 0.0
  %1517 = vmatprep.subr.mxu0 0.0
  %1518 = vmatpush1.msra.mxu0 0.0
  %1519 = vmatprep.subr.mxu0 0.0
  %1520 = vmatpush1.msra.mxu0 0.0
  %1521 = vmatprep.subr.mxu0 0.0
  %1522 = vmatpush1.msra.mxu0 0.0
  %1523 = vmatprep.subr.mxu0 0.0
  %1524 = vmatpush1.msra.mxu0 0.0
  %1525 = vmatprep.subr.mxu0 0.0
  %1526 = vmatpush1.msra.mxu0 0.0
  %1527 = vmatprep.subr.mxu0 0.0
  %1528 = vmatpush1.msra.mxu0 0.0
  %1529 = vmatprep.subr.mxu0 0.0
  %1530 = vmatpush1.msra.mxu0 0.0
  %1531 = vmatprep.subr.mxu0 0.0
  %1532 = vmatpush1.msra.mxu0 0.0
  %1533 = vmatprep.subr.mxu0 0.0
  %1534 = vmatpush1.msra.mxu0 0.0
  %1535 = vmatprep.subr.mxu0 0.0
  %1536 = vmatpush1.msra.mxu0 0.0
  %1537 = vmatprep.subr.mxu0 0.0
  %1538 = vmatpush1.msra.mxu0 0.0
  %1539 = vmatprep.mubr.f32.mxu0 0.0
  %1540 = vmatmul.mubr.f32.gmra.mrb[0].mxu0 %v1452
  %v1541 = vpop.f32.mrb[0].mxu0
  %v1542 = vadd.f32 0.0, %v1541
  %v1543 = vpop.f32.mrb[0].mxu0
  %1544 = vmatprep.mubr.f32.mxu0 0.0
  %1545 = vmatmul.mubr.f32.gmra.mrb[0].mxu0 %v1455
  %v1546 = vpop.f32.mrb[0].mxu0
  %v1547 = vadd.f32 0.0, %v1546
  %v1548 = vpop.f32.mrb[0].mxu0
  %1549 = vmatprep.mubr.f32.mxu0 0.0
  %1550 = vmatmul.mubr.f32.gmra.mrb[0].mxu0 %v1458
  %v1551 = vpop.f32.mrb[0].mxu0
  %v1552 = vadd.f32 0.0, %v1551
  %v1553 = vpop.f32.mrb[0].mxu0
  %1554 = vmatprep.mubr.f32.mxu0 0.0
  %1555 = vmatmul.mubr.f32.gmra.mrb[0].mxu0 %v1461
  %v1556 = vpop.f32.mrb[0].mxu0
  %v1557 = vadd.f32 0.0, %v1556
  %v1558 = vpop.f32.mrb[0].mxu0
  %1559 = vmatprep.mubr.f32.mxu0 0.0
  %1560 = vmatmul.mubr.f32.gmra.mrb[0].mxu0 %v1464
  %v1561 = vpop.f32.mrb[0].mxu0
  %v1562 = vadd.f32 0.0, %v1561
  %v1563 = vpop.f32.mrb[0].mxu0
  %1564 = vmatprep.mubr.f32.mxu0 0.0
  %1565 = vmatmul.mubr.f32.gmra.mrb[0].mxu0 %v1467
  %v1566 = vpop.f32.mrb[0].mxu0
  %v1567 = vadd.f32 0.0, %v1566
  %v1568 = vpop.f32.mrb[0].mxu0
  %1569 = vmatprep.mubr.f32.mxu0 0.0
  %1570 = vmatmul.mubr.f32.gmra.mrb[0].mxu0 %v1470
  %v1571 = vpop.f32.mrb[0].mxu0
  %v1572 = vadd.f32 0.0, %v1571
  %v1573 = vpop.f32.mrb[0].mxu0
  %1574 = vmatprep.mubr.f32.mxu0 0.0
  %1575 = vmatmul.mubr.f32.gmra.mrb[0].mxu0 %v1473
  %v1576 = vpop.f32.mrb[0].mxu0
  %v1577 = vadd.f32 0.0, %v1576
  %v1578 = vpop.f32.mrb[0].mxu0
  %1579 = vdwg.mxu0
  %v1580 = vadd.f32 %v26, %v1542
  %v1581 = vadd.f32 %v27, %v1547
  %v1582 = vadd.f32 %v28, %v1552
  %v1583 = vadd.f32 %v29, %v1557
  %v1584 = vadd.f32 %v30, %v1562
  %v1585 = vadd.f32 %v31, %v1567
  %v1586 = vadd.f32 %v32, %v1572
  %v1587 = vadd.f32 %v33, %v1577
  %v1589 = vlaneseq
  %v1590 = vshrl.u32 %v1589, 7
  %v1591 = vsub.s32 0, %v1590
  %v1592 = vrot.slane %v1448, %v1591
  %v1594 = vadd.f32 %v1580, %v1592
  %v1595 = vadd.f32 %v1581, %v1592
  %v1596 = vadd.f32 %v1582, %v1592
  %v1597 = vadd.f32 %v1583, %v1592
  %v1598 = vadd.f32 %v1584, %v1592
  %v1599 = vadd.f32 %v1585, %v1592
  %v1600 = vadd.f32 %v1586, %v1592
  %v1601 = vadd.f32 %v1587, %v1592
  %v1602 = vld [vmem:[%s3 + $0x10] sm:$0xff]
  %v1603 = vld [vmem:[%s3 + $0x18] sm:$0xff]
  %1604 = vrot.lane.b32.xlu0 %v1592, 112
  %v1605 = vpop.permute.xlu0 %1604
  %v1608 = vsel %vm43, %v1594, 0
  %v1611 = vsel %vm43, %v1595, 0
  %v1614 = vsel %vm43, %v1596, 0
  %v1617 = vsel %vm43, %v1597, 0
  %v1620 = vsel %vm43, %v1598, 0
  %v1623 = vsel %vm43, %v1599, 0
  %v1626 = vsel %vm43, %v1600, 0
  %v1629 = vsel %vm43, %v1601, 0
  %1631 = vmatprep.subr.mxu0 0.0
  %1632 = vmatpush1.msra.mxu0 %v1602
  %1633 = vmatprep.subr.mxu0 0.0
  %1634 = vmatpush1.msra.mxu0 %v1603
  %1635 = vmatprep.subr.mxu0 0.0
  %1636 = vmatpush1.msra.mxu0 0.0
  %1637 = vmatprep.subr.mxu0 0.0
  %1638 = vmatpush1.msra.mxu0 0.0
  %1639 = vmatprep.subr.mxu0 0.0
  %1640 = vmatpush1.msra.mxu0 0.0
  %1641 = vmatprep.subr.mxu0 0.0
  %1642 = vmatpush1.msra.mxu0 0.0
  %1643 = vmatprep.subr.mxu0 0.0
  %1644 = vmatpush1.msra.mxu0 0.0
  %1645 = vmatprep.subr.mxu0 0.0
  %1646 = vmatpush1.msra.mxu0 0.0
  %1647 = vmatprep.subr.mxu0 0.0
  %1648 = vmatpush1.msra.mxu0 0.0
  %1649 = vmatprep.subr.mxu0 0.0
  %1650 = vmatpush1.msra.mxu0 0.0
  %1651 = vmatprep.subr.mxu0 0.0
  %1652 = vmatpush1.msra.mxu0 0.0
  %1653 = vmatprep.subr.mxu0 0.0
  %1654 = vmatpush1.msra.mxu0 0.0
  %1655 = vmatprep.subr.mxu0 0.0
  %1656 = vmatpush1.msra.mxu0 0.0
  %1657 = vmatprep.subr.mxu0 0.0
  %1658 = vmatpush1.msra.mxu0 0.0
  %1659 = vmatprep.subr.mxu0 0.0
  %1660 = vmatpush1.msra.mxu0 0.0
  %1661 = vmatprep.subr.mxu0 0.0
  %1662 = vmatpush1.msra.mxu0 0.0
  %1663 = vmatprep.subr.mxu0 0.0
  %1664 = vmatpush1.msra.mxu0 0.0
  %1665 = vmatprep.subr.mxu0 0.0
  %1666 = vmatpush1.msra.mxu0 0.0
  %1667 = vmatprep.subr.mxu0 0.0
  %1668 = vmatpush1.msra.mxu0 0.0
  %1669 = vmatprep.subr.mxu0 0.0
  %1670 = vmatpush1.msra.mxu0 0.0
  %1671 = vmatprep.subr.mxu0 0.0
  %1672 = vmatpush1.msra.mxu0 0.0
  %1673 = vmatprep.subr.mxu0 0.0
  %1674 = vmatpush1.msra.mxu0 0.0
  %1675 = vmatprep.subr.mxu0 0.0
  %1676 = vmatpush1.msra.mxu0 0.0
  %1677 = vmatprep.subr.mxu0 0.0
  %1678 = vmatpush1.msra.mxu0 0.0
  %1679 = vmatprep.subr.mxu0 0.0
  %1680 = vmatpush1.msra.mxu0 0.0
  %1681 = vmatprep.subr.mxu0 0.0
  %1682 = vmatpush1.msra.mxu0 0.0
  %1683 = vmatprep.subr.mxu0 0.0
  %1684 = vmatpush1.msra.mxu0 0.0
  %1685 = vmatprep.subr.mxu0 0.0
  %1686 = vmatpush1.msra.mxu0 0.0
  %1687 = vmatprep.subr.mxu0 0.0
  %1688 = vmatpush1.msra.mxu0 0.0
  %1689 = vmatprep.subr.mxu0 0.0
  %1690 = vmatpush1.msra.mxu0 0.0
  %1691 = vmatprep.subr.mxu0 0.0
  %1692 = vmatpush1.msra.mxu0 0.0
  %1693 = vmatprep.subr.mxu0 0.0
  %1694 = vmatpush1.msra.mxu0 0.0
  %1695 = vmatprep.mubr.f32.mxu0 0.0
  %1696 = vmatmul.mubr.f32.gmra.mrb[0].mxu0 %v1608
  %v1697 = vpop.f32.mrb[0].mxu0
  %v1698 = vadd.f32 %v1605, %v1697
  %v1699 = vpop.f32.mrb[0].mxu0
  %1700 = vmatprep.mubr.f32.mxu0 0.0
  %1701 = vmatmul.mubr.f32.gmra.mrb[0].mxu0 %v1611
  %v1702 = vpop.f32.mrb[0].mxu0
  %v1703 = vadd.f32 %v1605, %v1702
  %v1704 = vpop.f32.mrb[0].mxu0
  %1705 = vmatprep.mubr.f32.mxu0 0.0
  %1706 = vmatmul.mubr.f32.gmra.mrb[0].mxu0 %v1614
  %v1707 = vpop.f32.mrb[0].mxu0
  %v1708 = vadd.f32 %v1605, %v1707
  %v1709 = vpop.f32.mrb[0].mxu0
  %1710 = vmatprep.mubr.f32.mxu0 0.0
  %1711 = vmatmul.mubr.f32.gmra.mrb[0].mxu0 %v1617
  %v1712 = vpop.f32.mrb[0].mxu0
  %v1713 = vadd.f32 %v1605, %v1712
  %v1714 = vpop.f32.mrb[0].mxu0
  %1715 = vmatprep.mubr.f32.mxu0 0.0
  %1716 = vmatmul.mubr.f32.gmra.mrb[0].mxu0 %v1620
  %v1717 = vpop.f32.mrb[0].mxu0
  %v1718 = vadd.f32 %v1605, %v1717
  %v1719 = vpop.f32.mrb[0].mxu0
  %1720 = vmatprep.mubr.f32.mxu0 0.0
  %1721 = vmatmul.mubr.f32.gmra.mrb[0].mxu0 %v1623
  %v1722 = vpop.f32.mrb[0].mxu0
  %v1723 = vadd.f32 %v1605, %v1722
  %v1724 = vpop.f32.mrb[0].mxu0
  %1725 = vmatprep.mubr.f32.mxu0 0.0
  %1726 = vmatmul.mubr.f32.gmra.mrb[0].mxu0 %v1626
  %v1727 = vpop.f32.mrb[0].mxu0
  %v1728 = vadd.f32 %v1605, %v1727
  %v1729 = vpop.f32.mrb[0].mxu0
  %1730 = vmatprep.mubr.f32.mxu0 0.0
  %1731 = vmatmul.mubr.f32.gmra.mrb[0].mxu0 %v1629
  %v1732 = vpop.f32.mrb[0].mxu0
  %v1733 = vadd.f32 %v1605, %v1732
  %v1734 = vpop.f32.mrb[0].mxu0
  %1735 = vdwg.mxu0
  %v1736 = vld [vmem:[%s3 + $0x20] sm:$0xff]
  %v1737 = vld [vmem:[%s3 + $0x28] sm:$0xff]
  %1738 = vrot.lane.b32.xlu0 %v1592, 96
  %v1739 = vpop.permute.xlu0 %1738
  %v1742 = vsel %vm43, %v1698, 0
  %v1745 = vsel %vm43, %v1703, 0
  %v1748 = vsel %vm43, %v1708, 0
  %v1751 = vsel %vm43, %v1713, 0
  %v1754 = vsel %vm43, %v1718, 0
  %v1757 = vsel %vm43, %v1723, 0
  %v1760 = vsel %vm43, %v1728, 0
  %v1763 = vsel %vm43, %v1733, 0
  %1765 = vmatprep.subr.mxu0 0.0
  %1766 = vmatpush1.msra.mxu0 %v1736
  %1767 = vmatprep.subr.mxu0 0.0
  %1768 = vmatpush1.msra.mxu0 %v1737
  %1769 = vmatprep.subr.mxu0 0.0
  %1770 = vmatpush1.msra.mxu0 0.0
  %1771 = vmatprep.subr.mxu0 0.0
  %1772 = vmatpush1.msra.mxu0 0.0
  %1773 = vmatprep.subr.mxu0 0.0
  %1774 = vmatpush1.msra.mxu0 0.0
  %1775 = vmatprep.subr.mxu0 0.0
  %1776 = vmatpush1.msra.mxu0 0.0
  %1777 = vmatprep.subr.mxu0 0.0
  %1778 = vmatpush1.msra.mxu0 0.0
  %1779 = vmatprep.subr.mxu0 0.0
  %1780 = vmatpush1.msra.mxu0 0.0
  %1781 = vmatprep.subr.mxu0 0.0
  %1782 = vmatpush1.msra.mxu0 0.0
  %1783 = vmatprep.subr.mxu0 0.0
  %1784 = vmatpush1.msra.mxu0 0.0
  %1785 = vmatprep.subr.mxu0 0.0
  %1786 = vmatpush1.msra.mxu0 0.0
  %1787 = vmatprep.subr.mxu0 0.0
  %1788 = vmatpush1.msra.mxu0 0.0
  %1789 = vmatprep.subr.mxu0 0.0
  %1790 = vmatpush1.msra.mxu0 0.0
  %1791 = vmatprep.subr.mxu0 0.0
  %1792 = vmatpush1.msra.mxu0 0.0
  %1793 = vmatprep.subr.mxu0 0.0
  %1794 = vmatpush1.msra.mxu0 0.0
  %1795 = vmatprep.subr.mxu0 0.0
  %1796 = vmatpush1.msra.mxu0 0.0
  %1797 = vmatprep.subr.mxu0 0.0
  %1798 = vmatpush1.msra.mxu0 0.0
  %1799 = vmatprep.subr.mxu0 0.0
  %1800 = vmatpush1.msra.mxu0 0.0
  %1801 = vmatprep.subr.mxu0 0.0
  %1802 = vmatpush1.msra.mxu0 0.0
  %1803 = vmatprep.subr.mxu0 0.0
  %1804 = vmatpush1.msra.mxu0 0.0
  %1805 = vmatprep.subr.mxu0 0.0
  %1806 = vmatpush1.msra.mxu0 0.0
  %1807 = vmatprep.subr.mxu0 0.0
  %1808 = vmatpush1.msra.mxu0 0.0
  %1809 = vmatprep.subr.mxu0 0.0
  %1810 = vmatpush1.msra.mxu0 0.0
  %1811 = vmatprep.subr.mxu0 0.0
  %1812 = vmatpush1.msra.mxu0 0.0
  %1813 = vmatprep.subr.mxu0 0.0
  %1814 = vmatpush1.msra.mxu0 0.0
  %1815 = vmatprep.subr.mxu0 0.0
  %1816 = vmatpush1.msra.mxu0 0.0
  %1817 = vmatprep.subr.mxu0 0.0
  %1818 = vmatpush1.msra.mxu0 0.0
  %1819 = vmatprep.subr.mxu0 0.0
  %1820 = vmatpush1.msra.mxu0 0.0
  %1821 = vmatprep.subr.mxu0 0.0
  %1822 = vmatpush1.msra.mxu0 0.0
  %1823 = vmatprep.subr.mxu0 0.0
  %1824 = vmatpush1.msra.mxu0 0.0
  %1825 = vmatprep.subr.mxu0 0.0
  %1826 = vmatpush1.msra.mxu0 0.0
  %1827 = vmatprep.subr.mxu0 0.0
  %1828 = vmatpush1.msra.mxu0 0.0
  %1829 = vmatprep.mubr.f32.mxu0 0.0
  %1830 = vmatmul.mubr.f32.gmra.mrb[0].mxu0 %v1742
  %v1831 = vpop.f32.mrb[0].mxu0
  %v1832 = vadd.f32 %v1739, %v1831
  %v1833 = vpop.f32.mrb[0].mxu0
  %1834 = vmatprep.mubr.f32.mxu0 0.0
  %1835 = vmatmul.mubr.f32.gmra.mrb[0].mxu0 %v1745
  %v1836 = vpop.f32.mrb[0].mxu0
  %v1837 = vadd.f32 %v1739, %v1836
  %v1838 = vpop.f32.mrb[0].mxu0
  %1839 = vmatprep.mubr.f32.mxu0 0.0
  %1840 = vmatmul.mubr.f32.gmra.mrb[0].mxu0 %v1748
  %v1841 = vpop.f32.mrb[0].mxu0
  %v1842 = vadd.f32 %v1739, %v1841
  %v1843 = vpop.f32.mrb[0].mxu0
  %1844 = vmatprep.mubr.f32.mxu0 0.0
  %1845 = vmatmul.mubr.f32.gmra.mrb[0].mxu0 %v1751
  %v1846 = vpop.f32.mrb[0].mxu0
  %v1847 = vadd.f32 %v1739, %v1846
  %v1848 = vpop.f32.mrb[0].mxu0
  %1849 = vmatprep.mubr.f32.mxu0 0.0
  %1850 = vmatmul.mubr.f32.gmra.mrb[0].mxu0 %v1754
  %v1851 = vpop.f32.mrb[0].mxu0
  %v1852 = vadd.f32 %v1739, %v1851
  %v1853 = vpop.f32.mrb[0].mxu0
  %1854 = vmatprep.mubr.f32.mxu0 0.0
  %1855 = vmatmul.mubr.f32.gmra.mrb[0].mxu0 %v1757
  %v1856 = vpop.f32.mrb[0].mxu0
  %v1857 = vadd.f32 %v1739, %v1856
  %v1858 = vpop.f32.mrb[0].mxu0
  %1859 = vmatprep.mubr.f32.mxu0 0.0
  %1860 = vmatmul.mubr.f32.gmra.mrb[0].mxu0 %v1760
  %v1861 = vpop.f32.mrb[0].mxu0
  %v1862 = vadd.f32 %v1739, %v1861
  %v1863 = vpop.f32.mrb[0].mxu0
  %1864 = vmatprep.mubr.f32.mxu0 0.0
  %1865 = vmatmul.mubr.f32.gmra.mrb[0].mxu0 %v1763
  %v1866 = vpop.f32.mrb[0].mxu0
  %v1867 = vadd.f32 %v1739, %v1866
  %v1868 = vpop.f32.mrb[0].mxu0
  %1869 = vdwg.mxu0
  %v1870 = vadd.f32 %v1594, %v1832
  %v1871 = vadd.f32 %v1595, %v1837
  %v1872 = vadd.f32 %v1596, %v1842
  %v1873 = vadd.f32 %v1597, %v1847
  %v1874 = vadd.f32 %v1598, %v1852
  %v1875 = vadd.f32 %v1599, %v1857
  %v1876 = vadd.f32 %v1600, %v1862
  %v1877 = vadd.f32 %v1601, %v1867
  %1878 = vst.msk [vmem:[%s7] sm:$0xff] %vm43, %v1870
  %1879 = vst.msk [vmem:[%s7 + $0x8] sm:$0xff] %vm43, %v1871
  %1880 = vst.msk [vmem:[%s7 + $0x10] sm:$0xff] %vm43, %v1872
  %1881 = vst.msk [vmem:[%s7 + $0x18] sm:$0xff] %vm43, %v1873
  %1882 = vst.msk [vmem:[%s7 + $0x20] sm:$0xff] %vm43, %v1874
  %1883 = vst.msk [vmem:[%s7 + $0x28] sm:$0xff] %vm43, %v1875
  %1884 = vst.msk [vmem:[%s7 + $0x30] sm:$0xff] %vm43, %v1876
  %1885 = vst.msk [vmem:[%s7 + $0x38] sm:$0xff] %vm43, %v1877
  // Predicated region
  $region30: #{tpu_custom_call.1} parent=0 // pred_check
    _
  $region31: #{tpu_custom_call.1} parent=0 // pred_check_branch
    %1887 = sbr.rel (0) target = $region33
  $region32: #{tpu_custom_call.1} parent=0 // pred_region
    _
  $region33: #{tpu_custom_call.1} parent=0 // pred_fallthru
    _
  // Predicated region
  $region34: #{tpu_custom_call.1} parent=0 // pred_check
    _
  $region35: #{tpu_custom_call.1} parent=0 // pred_check_branch
    %1889 = sbr.rel (0) target = $region37
  $region36: #{tpu_custom_call.1} parent=0 // pred_region
    _
  $region37: #{tpu_custom_call.1} parent=0 // pred_fallthru
    _

</llo_original>
